<compile_context>
chip_gen: v5e
topology: v5e:2x2
jax: 0.10.0
libtpu: 0.0.40
codegen_flags: <defaults>
</compile_context>

<pallas_src>
import functools

import jax
import jax.numpy as jnp
from jax import lax
from jax.experimental import pallas as pl
from jax.experimental.pallas import tpu as pltpu


# MXU-operand / inter-layer activation dtype.  Accumulation and the epilogue
# (scale/shift + LeakyReLU) stay f32 on every generation.
_MXU_DTYPE = jnp.bfloat16


# ----------------------------------------------------------------------------
# 4x4 / stride-2 / pad-1 conv (bias=False) + per-channel scale/shift + LeakyReLU.
# grid = (batch_blocks,). The input has been padded and 2x2 phase-split on the
# host so that x_ph[b*4 + rh*2 + rw, i, j, c] == x_pad[b, 2i + rh, 2j + rw, c]
# and every tap read in the kernel is a contiguous *static* slice.
# ----------------------------------------------------------------------------
def _conv_s2_kernel(x_ref, w_ref, scale_ref, shift_ref, o_ref, *,
                    bb, cin, cout, ho, wo):
    # ---- in-VMEM im2col pack: (bb*ho*wo, 16*cin) bf16 LHS -------------------
    # TODO(synk): 8 of the 16 taps use a sublane offset of 1 (qw=1); a one-time
    #             pre-shift per phase would halve the XLU relayout traffic.
    rows = []
    for img in range(bb):
        taps = []
        for kh in range(4):
            rh, qh = kh % 2, kh // 2
            for kw in range(4):
                rw, qw = kw % 2, kw // 2
                t = x_ref[img * 4 + rh * 2 + rw, qh:qh + ho, qw:qw + wo, :]
                taps.append(t.reshape(ho * wo, cin))
        rows.append(jnp.concatenate(taps, axis=-1))          # (ho*wo, 16*cin)
    lhs = rows[0] if bb == 1 else jnp.concatenate(rows, axis=0)

    # ---- single MXU matmul, f32 accumulation --------------------------------
    acc = jnp.dot(lhs, w_ref[...], preferred_element_type=jnp.float32)

    # ---- f32 epilogue: folded BatchNorm (or identity) + LeakyReLU(0.2) ------
    y = acc * scale_ref[...] + shift_ref[...]
    y = jnp.maximum(y, 0.2 * y)
    # One lane-dense (channels-last) store for the whole block.
    o_ref[...] = y.reshape(bb, ho, wo, cout).astype(o_ref.dtype)


def conv4x4_s2_lrelu(x, w, scale, shift, *, batch_block=None):
    """x: (B, H, W, Cin) channels-last; w: (Cout, Cin, 4, 4); scale/shift: (Cout,)."""
    bsz, hin, win, cin = x.shape
    cout = w.shape[0]
    ho, wo = hin // 2, win // 2
    hq, wq = ho + 1, wo + 1

    # Batch blocking: amortize per-grid-step overhead on small-spatial layers,
    # but keep the grid length >= 2 when possible (v7x dual-TensorCore).
    if batch_block is None:
        bb = max(1, min(bsz, 128 // max(1, ho * wo)))
        if bsz >= 2:
            bb = max(1, min(bb, bsz // 2))
        while bsz % bb:
            bb -= 1
    else:
        bb = batch_block
        assert bsz % bb == 0

    # Host-side prep (tiny layout plumbing): pad by 1 and split into 2x2 phases.
    # TODO(synk): fold this into the previous layer's store epilogue to drop the
    #             inter-layer HBM round trip.
    xp = jnp.pad(x, ((0, 0), (1, 1), (1, 1), (0, 0))).astype(_MXU_DTYPE)
    x_ph = xp.reshape(bsz, hq, 2, wq, 2, cin).transpose(0, 2, 4, 1, 3, 5)
    x_ph = x_ph.reshape(bsz * 4, hq, wq, cin)

    # im2col RHS in VMEM, K ordered (kh, kw, cin) to match the in-kernel pack.
    w_rhs = jnp.transpose(w, (2, 3, 1, 0)).reshape(16 * cin, cout).astype(_MXU_DTYPE)

    kern = functools.partial(_conv_s2_kernel, bb=bb, cin=cin, cout=cout, ho=ho, wo=wo)
    return pl.pallas_call(
        kern,
        out_shape=jax.ShapeDtypeStruct((bsz, ho, wo, cout), _MXU_DTYPE),
        grid_spec=pltpu.PrefetchScalarGridSpec(
            num_scalar_prefetch=0,
            grid=(bsz // bb,),
            in_specs=[
                pl.BlockSpec((bb * 4, hq, wq, cin), lambda i: (i, 0, 0, 0)),
                pl.BlockSpec((16 * cin, cout), lambda i: (0, 0)),   # weights in VMEM
                pl.BlockSpec((1, cout), lambda i: (0, 0)),          # scale (f32)
                pl.BlockSpec((1, cout), lambda i: (0, 0)),          # shift (f32)
            ],
            out_specs=pl.BlockSpec((bb, ho, wo, cout), lambda i: (i, 0, 0, 0)),
        ),
        compiler_params=pltpu.CompilerParams(
            dimension_semantics=("parallel",)),
    )(x_ph, w_rhs,
      scale.reshape(1, cout).astype(jnp.float32),
      shift.reshape(1, cout).astype(jnp.float32))


# ----------------------------------------------------------------------------
# Final Conv2d(cndf, 1, 4, 1, 0, bias=False) on a (B, 4, 4, cndf) feature map
# fused with the batch mean:  out = mean_b( <x_b, w> )   -> shape (1,).
# Single grid step; the flattened K axis (4*4*cndf) is lane-dense.
# ----------------------------------------------------------------------------
def _final_mean_kernel(x_ref, w_ref, o_ref):
    per_img = jnp.dot(x_ref[...], w_ref[...],
                      preferred_element_type=jnp.float32)       # (B, 1)
    o_ref[...] = jnp.mean(per_img, axis=0, keepdims=True)       # (1, 1)


def final_conv_mean(x, w):
    """x: (B, 4, 4, C) channels-last; w: (1, C, 4, 4). Returns shape (1,)."""
    bsz, h, wd, c = x.shape
    k = h * wd * c
    x_flat = x.reshape(bsz, k).astype(_MXU_DTYPE)
    w_flat = jnp.transpose(w, (2, 3, 1, 0)).reshape(k, 1).astype(_MXU_DTYPE)
    out = pl.pallas_call(
        _final_mean_kernel,
        out_shape=jax.ShapeDtypeStruct((1, 1), jnp.float32),
        grid_spec=pltpu.PrefetchScalarGridSpec(
            num_scalar_prefetch=0,
            grid=(1,),
            in_specs=[pl.BlockSpec((bsz, k), lambda i: (0, 0)),
                      pl.BlockSpec((k, 1), lambda i: (0, 0))],
            out_specs=pl.BlockSpec((1, 1), lambda i: (0, 0)),
        ),
        compiler_params=pltpu.CompilerParams(
            dimension_semantics=("arbitrary",)),
    )(x_flat, w_flat)
    return out.reshape(1)


# ----------------------------------------------------------------------------
# Full forward pass (DCGAN_D.forward).
# ----------------------------------------------------------------------------
def _fold_bn(gamma, beta, mean, var, eps=1e-5):
    scale = gamma * lax.rsqrt(var + eps)
    shift = beta - mean * scale
    return scale, shift


def dcgan_d_forward(params, x):
    # x: (B, nc, H, W), NCHW like the PyTorch module; go channels-last inside.
    ndf = params["w0"].shape[0]
    h = jnp.transpose(x, (0, 2, 3, 1))
    # initial: conv(nc -> ndf, 4, 2, 1, bias=False) + LeakyReLU(0.2)
    h = conv4x4_s2_lrelu(h, params["w0"],
                         jnp.ones((ndf,), jnp.float32),
                         jnp.zeros((ndf,), jnp.float32))
    # TODO(synk): n_extra_layers > 0 blocks (3x3 conv + BN + LeakyReLU) not
    #             implemented; the module default is n_extra_layers=0.
    # pyramid: conv(c -> 2c, 4, 2, 1) + BatchNorm2d(2c) + LeakyReLU(0.2)
    # TODO(synk): BatchNorm2d is implemented in eval mode (running stats folded
    #             into per-channel scale/shift); training-mode batch statistics
    #             are not implemented.
    for blk in params["pyramid"]:
        scale, shift = _fold_bn(blk["gamma"], blk["beta"], blk["mean"], blk["var"])
        h = conv4x4_s2_lrelu(h, blk["w"], scale, shift)
    # final conv(c -> 1, 4, 1, 0) fused with .mean(0).view(1)
    # TODO(synk): the ngpu / data_parallel branch is a device-placement detail
    #             with no numerical effect; ignored.
    return final_conv_mean(h, params["w_final"])


# ----------------------------------------------------------------------------
# Pure-JAX f32 reference (same eval-mode BN semantics) for a sanity check.
# ----------------------------------------------------------------------------
def _ref_forward(params, x):
    dn = ("NCHW", "OIHW", "NCHW")

    def lrelu(y):
        return jnp.where(y > 0, y, 0.2 * y)

    h = lax.conv_general_dilated(x, params["w0"], (2, 2), ((1, 1), (1, 1)),
                                 dimension_numbers=dn)
    h = lrelu(h)
    for blk in params["pyramid"]:
        h = lax.conv_general_dilated(h, blk["w"], (2, 2), ((1, 1), (1, 1)),
                                     dimension_numbers=dn)
        scale, shift = _fold_bn(blk["gamma"], blk["beta"], blk["mean"], blk["var"])
        h = lrelu(h * scale[None, :, None, None] + shift[None, :, None, None])
    y = lax.conv_general_dilated(h, params["w_final"], (1, 1), "VALID",
                                 dimension_numbers=dn)
    return jnp.mean(y, axis=0).reshape(1)


# ----------------------------------------------------------------------------
# Parameter construction mirroring DCGAN_D.__init__ (n_extra_layers=0).
# ----------------------------------------------------------------------------
def init_dcgan_d_params(key, isize, nc, ndf):
    assert isize % 16 == 0, "isize has to be a multiple of 16"
    keys = iter(jax.random.split(key, 64))
    params = {"w0": 0.05 * jax.random.normal(next(keys), (ndf, nc, 4, 4), jnp.float32)}
    csize, cndf = isize // 2, ndf
    pyramid = []
    while csize > 4:
        out_feat = cndf * 2
        pyramid.append({
            "w": 0.05 * jax.random.normal(next(keys), (out_feat, cndf, 4, 4), jnp.float32),
            "gamma": 1.0 + 0.05 * jax.random.normal(next(keys), (out_feat,), jnp.float32),
            "beta": 0.05 * jax.random.normal(next(keys), (out_feat,), jnp.float32),
            "mean": 0.05 * jax.random.normal(next(keys), (out_feat,), jnp.float32),
            "var": 1.0 + 0.05 * jnp.abs(jax.random.normal(next(keys), (out_feat,), jnp.float32)),
        })
        cndf *= 2
        csize //= 2
    params["pyramid"] = pyramid
    params["w_final"] = 0.05 * jax.random.normal(next(keys), (1, cndf, 4, 4), jnp.float32)
    return params


if __name__ == "__main__":
    key = jax.random.PRNGKey(0)
    kp, kx = jax.random.split(key)

    # Small shapes consistent with the module: isize multiple of 16.
    B, nc, isize, ndf = 2, 3, 16, 8
    params = init_dcgan_d_params(kp, isize, nc, ndf)
    x = jax.random.normal(kx, (B, nc, isize, isize), jnp.float32)

    fwd = jax.jit(dcgan_d_forward)
    out = jax.block_until_ready(fwd(params, x))

    assert out.shape == (1,), out.shape
    assert bool(jnp.all(jnp.isfinite(out)))

    ref = jax.block_until_ready(jax.jit(_ref_forward)(params, x))
    # bf16 MXU operands / f32 accumulation vs. the pure-f32 reference.
    assert bool(jnp.allclose(out, ref, atol=2e-2, rtol=2e-2)), \
        float(jnp.max(jnp.abs(out - ref)))

    print("KERNEL_OK")
</pallas_src>

<mosaic_0001>
module attributes {stable_mosaic.version = 11 : i64} {
  func.func @_conv_s2_kernel(%arg0: i32, %arg1: memref<4x9x9x3xbf16, #tpu.memory_space<vmem>>, %arg2: memref<48x8xbf16, #tpu.memory_space<vmem>>, %arg3: memref<1x8xf32, #tpu.memory_space<vmem>>, %arg4: memref<1x8xf32, #tpu.memory_space<vmem>>, %arg5: memref<1x8x8x8xbf16, #tpu.memory_space<vmem>>) attributes {dimension_semantics = [#tpu.dimension_semantics<parallel>], iteration_bounds = array<i64: 2>, scalar_prefetch = 0 : i64, scratch_operands = 0 : i64, tpu.core_type = #tpu.core_type<tc>, window_params = [{transform_indices = @transform_0, window_bounds = array<i64: 4, 9, 9, 3>}, {pipeline_mode = #tpu.pipeline_mode<synchronous>, transform_indices = @transform_1, window_bounds = array<i64: 48, 8>}, {pipeline_mode = #tpu.pipeline_mode<synchronous>, transform_indices = @transform_2, window_bounds = array<i64: 1, 8>}, {pipeline_mode = #tpu.pipeline_mode<synchronous>, transform_indices = @transform_3, window_bounds = array<i64: 1, 8>}, {transform_indices = @transform_4, window_bounds = array<i64: 1, 8, 8, 8>}]} {
    %c0 = arith.constant 0 : index
    %c0_0 = arith.constant 0 : index
    %c0_1 = arith.constant 0 : index
    %c0_2 = arith.constant 0 : index
    %0 = vector.load %arg1[%c0, %c0_0, %c0_1, %c0_2] : memref<4x9x9x3xbf16, #tpu.memory_space<vmem>>, vector<1x8x8x3xbf16>
    %1 = vector.shape_cast %0 : vector<1x8x8x3xbf16> to vector<8x8x3xbf16>
    %2 = vector.shape_cast %1 : vector<8x8x3xbf16> to vector<64x3xbf16>
    %c1 = arith.constant 1 : index
    %c0_3 = arith.constant 0 : index
    %c0_4 = arith.constant 0 : index
    %c0_5 = arith.constant 0 : index
    %3 = vector.load %arg1[%c1, %c0_3, %c0_4, %c0_5] : memref<4x9x9x3xbf16, #tpu.memory_space<vmem>>, vector<1x8x8x3xbf16>
    %4 = vector.shape_cast %3 : vector<1x8x8x3xbf16> to vector<8x8x3xbf16>
    %5 = vector.shape_cast %4 : vector<8x8x3xbf16> to vector<64x3xbf16>
    %c0_6 = arith.constant 0 : index
    %c0_7 = arith.constant 0 : index
    %c1_8 = arith.constant 1 : index
    %c0_9 = arith.constant 0 : index
    %6 = vector.load %arg1[%c0_6, %c0_7, %c1_8, %c0_9] : memref<4x9x9x3xbf16, #tpu.memory_space<vmem>>, vector<1x8x8x3xbf16>
    %7 = vector.shape_cast %6 : vector<1x8x8x3xbf16> to vector<8x8x3xbf16>
    %8 = vector.shape_cast %7 : vector<8x8x3xbf16> to vector<64x3xbf16>
    %c1_10 = arith.constant 1 : index
    %c0_11 = arith.constant 0 : index
    %c1_12 = arith.constant 1 : index
    %c0_13 = arith.constant 0 : index
    %9 = vector.load %arg1[%c1_10, %c0_11, %c1_12, %c0_13] : memref<4x9x9x3xbf16, #tpu.memory_space<vmem>>, vector<1x8x8x3xbf16>
    %10 = vector.shape_cast %9 : vector<1x8x8x3xbf16> to vector<8x8x3xbf16>
    %11 = vector.shape_cast %10 : vector<8x8x3xbf16> to vector<64x3xbf16>
    %c2 = arith.constant 2 : index
    %c0_14 = arith.constant 0 : index
    %c0_15 = arith.constant 0 : index
    %c0_16 = arith.constant 0 : index
    %12 = vector.load %arg1[%c2, %c0_14, %c0_15, %c0_16] : memref<4x9x9x3xbf16, #tpu.memory_space<vmem>>, vector<1x8x8x3xbf16>
    %13 = vector.shape_cast %12 : vector<1x8x8x3xbf16> to vector<8x8x3xbf16>
    %14 = vector.shape_cast %13 : vector<8x8x3xbf16> to vector<64x3xbf16>
    %c3 = arith.constant 3 : index
    %c0_17 = arith.constant 0 : index
    %c0_18 = arith.constant 0 : index
    %c0_19 = arith.constant 0 : index
    %15 = vector.load %arg1[%c3, %c0_17, %c0_18, %c0_19] : memref<4x9x9x3xbf16, #tpu.memory_space<vmem>>, vector<1x8x8x3xbf16>
    %16 = vector.shape_cast %15 : vector<1x8x8x3xbf16> to vector<8x8x3xbf16>
    %17 = vector.shape_cast %16 : vector<8x8x3xbf16> to vector<64x3xbf16>
    %c2_20 = arith.constant 2 : index
    %c0_21 = arith.constant 0 : index
    %c1_22 = arith.constant 1 : index
    %c0_23 = arith.constant 0 : index
    %18 = vector.load %arg1[%c2_20, %c0_21, %c1_22, %c0_23] : memref<4x9x9x3xbf16, #tpu.memory_space<vmem>>, vector<1x8x8x3xbf16>
    %19 = vector.shape_cast %18 : vector<1x8x8x3xbf16> to vector<8x8x3xbf16>
    %20 = vector.shape_cast %19 : vector<8x8x3xbf16> to vector<64x3xbf16>
    %c3_24 = arith.constant 3 : index
    %c0_25 = arith.constant 0 : index
    %c1_26 = arith.constant 1 : index
    %c0_27 = arith.constant 0 : index
    %21 = vector.load %arg1[%c3_24, %c0_25, %c1_26, %c0_27] : memref<4x9x9x3xbf16, #tpu.memory_space<vmem>>, vector<1x8x8x3xbf16>
    %22 = vector.shape_cast %21 : vector<1x8x8x3xbf16> to vector<8x8x3xbf16>
    %23 = vector.shape_cast %22 : vector<8x8x3xbf16> to vector<64x3xbf16>
    %c0_28 = arith.constant 0 : index
    %c1_29 = arith.constant 1 : index
    %c0_30 = arith.constant 0 : index
    %c0_31 = arith.constant 0 : index
    %24 = vector.load %arg1[%c0_28, %c1_29, %c0_30, %c0_31] : memref<4x9x9x3xbf16, #tpu.memory_space<vmem>>, vector<1x8x8x3xbf16>
    %25 = vector.shape_cast %24 : vector<1x8x8x3xbf16> to vector<8x8x3xbf16>
    %26 = vector.shape_cast %25 : vector<8x8x3xbf16> to vector<64x3xbf16>
    %c1_32 = arith.constant 1 : index
    %c1_33 = arith.constant 1 : index
    %c0_34 = arith.constant 0 : index
    %c0_35 = arith.constant 0 : index
    %27 = vector.load %arg1[%c1_32, %c1_33, %c0_34, %c0_35] : memref<4x9x9x3xbf16, #tpu.memory_space<vmem>>, vector<1x8x8x3xbf16>
    %28 = vector.shape_cast %27 : vector<1x8x8x3xbf16> to vector<8x8x3xbf16>
    %29 = vector.shape_cast %28 : vector<8x8x3xbf16> to vector<64x3xbf16>
    %c0_36 = arith.constant 0 : index
    %c1_37 = arith.constant 1 : index
    %c1_38 = arith.constant 1 : index
    %c0_39 = arith.constant 0 : index
    %30 = vector.load %arg1[%c0_36, %c1_37, %c1_38, %c0_39] : memref<4x9x9x3xbf16, #tpu.memory_space<vmem>>, vector<1x8x8x3xbf16>
    %31 = vector.shape_cast %30 : vector<1x8x8x3xbf16> to vector<8x8x3xbf16>
    %32 = vector.shape_cast %31 : vector<8x8x3xbf16> to vector<64x3xbf16>
    %c1_40 = arith.constant 1 : index
    %c1_41 = arith.constant 1 : index
    %c1_42 = arith.constant 1 : index
    %c0_43 = arith.constant 0 : index
    %33 = vector.load %arg1[%c1_40, %c1_41, %c1_42, %c0_43] : memref<4x9x9x3xbf16, #tpu.memory_space<vmem>>, vector<1x8x8x3xbf16>
    %34 = vector.shape_cast %33 : vector<1x8x8x3xbf16> to vector<8x8x3xbf16>
    %35 = vector.shape_cast %34 : vector<8x8x3xbf16> to vector<64x3xbf16>
    %c2_44 = arith.constant 2 : index
    %c1_45 = arith.constant 1 : index
    %c0_46 = arith.constant 0 : index
    %c0_47 = arith.constant 0 : index
    %36 = vector.load %arg1[%c2_44, %c1_45, %c0_46, %c0_47] : memref<4x9x9x3xbf16, #tpu.memory_space<vmem>>, vector<1x8x8x3xbf16>
    %37 = vector.shape_cast %36 : vector<1x8x8x3xbf16> to vector<8x8x3xbf16>
    %38 = vector.shape_cast %37 : vector<8x8x3xbf16> to vector<64x3xbf16>
    %c3_48 = arith.constant 3 : index
    %c1_49 = arith.constant 1 : index
    %c0_50 = arith.constant 0 : index
    %c0_51 = arith.constant 0 : index
    %39 = vector.load %arg1[%c3_48, %c1_49, %c0_50, %c0_51] : memref<4x9x9x3xbf16, #tpu.memory_space<vmem>>, vector<1x8x8x3xbf16>
    %40 = vector.shape_cast %39 : vector<1x8x8x3xbf16> to vector<8x8x3xbf16>
    %41 = vector.shape_cast %40 : vector<8x8x3xbf16> to vector<64x3xbf16>
    %c2_52 = arith.constant 2 : index
    %c1_53 = arith.constant 1 : index
    %c1_54 = arith.constant 1 : index
    %c0_55 = arith.constant 0 : index
    %42 = vector.load %arg1[%c2_52, %c1_53, %c1_54, %c0_55] : memref<4x9x9x3xbf16, #tpu.memory_space<vmem>>, vector<1x8x8x3xbf16>
    %43 = vector.shape_cast %42 : vector<1x8x8x3xbf16> to vector<8x8x3xbf16>
    %44 = vector.shape_cast %43 : vector<8x8x3xbf16> to vector<64x3xbf16>
    %c3_56 = arith.constant 3 : index
    %c1_57 = arith.constant 1 : index
    %c1_58 = arith.constant 1 : index
    %c0_59 = arith.constant 0 : index
    %45 = vector.load %arg1[%c3_56, %c1_57, %c1_58, %c0_59] : memref<4x9x9x3xbf16, #tpu.memory_space<vmem>>, vector<1x8x8x3xbf16>
    %46 = vector.shape_cast %45 : vector<1x8x8x3xbf16> to vector<8x8x3xbf16>
    %47 = vector.shape_cast %46 : vector<8x8x3xbf16> to vector<64x3xbf16>
    %48 = tpu.concatenate %2, %5, %8, %11, %14, %17, %20, %23, %26, %29, %32, %35, %38, %41, %44, %47 in 1 : vector<64x3xbf16>, vector<64x3xbf16>, vector<64x3xbf16>, vector<64x3xbf16>, vector<64x3xbf16>, vector<64x3xbf16>, vector<64x3xbf16>, vector<64x3xbf16>, vector<64x3xbf16>, vector<64x3xbf16>, vector<64x3xbf16>, vector<64x3xbf16>, vector<64x3xbf16>, vector<64x3xbf16>, vector<64x3xbf16>, vector<64x3xbf16> -> vector<64x48xbf16>
    %c0_60 = arith.constant 0 : index
    %c0_61 = arith.constant 0 : index
    %49 = vector.load %arg2[%c0_60, %c0_61] : memref<48x8xbf16, #tpu.memory_space<vmem>>, vector<48x8xbf16>
    %cst = arith.constant dense<0.000000e+00> : vector<64x8xf32>
    %50 = tpu.matmul %48, %49, %cst {dimension_numbers = #tpu.dot_dimension_numbers<[1], [0], [0], [1], [0, 0, 1, 1], [], []>} : vector<64x48xbf16>, vector<48x8xbf16>, vector<64x8xf32> -> vector<64x8xf32>
    %c0_62 = arith.constant 0 : index
    %c0_63 = arith.constant 0 : index
    %51 = vector.load %arg3[%c0_62, %c0_63] : memref<1x8xf32, #tpu.memory_space<vmem>>, vector<1x8xf32>
    %52 = vector.broadcast %51 : vector<1x8xf32> to vector<64x8xf32>
    %53 = arith.mulf %50, %52 : vector<64x8xf32>
    %c0_64 = arith.constant 0 : index
    %c0_65 = arith.constant 0 : index
    %54 = vector.load %arg4[%c0_64, %c0_65] : memref<1x8xf32, #tpu.memory_space<vmem>>, vector<1x8xf32>
    %55 = vector.broadcast %54 : vector<1x8xf32> to vector<64x8xf32>
    %56 = arith.addf %53, %55 : vector<64x8xf32>
    %cst_66 = arith.constant 2.000000e-01 : f32
    %57 = vector.broadcast %cst_66 : f32 to vector<64x8xf32>
    %58 = arith.mulf %57, %56 : vector<64x8xf32>
    %59 = arith.maximumf %56, %58 : vector<64x8xf32>
    %60 = vector.shape_cast %59 : vector<64x8xf32> to vector<1x8x8x8xf32>
    %61 = arith.truncf %60 : vector<1x8x8x8xf32> to vector<1x8x8x8xbf16>
    %c0_67 = arith.constant 0 : index
    %c0_68 = arith.constant 0 : index
    %c0_69 = arith.constant 0 : index
    %c0_70 = arith.constant 0 : index
    %62 = vector.load %arg5[%c0_67, %c0_68, %c0_69, %c0_70] : memref<1x8x8x8xbf16, #tpu.memory_space<vmem>>, vector<1x8x8x8xbf16>
    tpu.vector_store %arg5[%c0_67, %c0_68, %c0_69, %c0_70], %61 {strides = array<i32>} : memref<1x8x8x8xbf16, #tpu.memory_space<vmem>>, vector<1x8x8x8xbf16>,
    return
  }
  func.func @transform_0(%arg0: i32) -> (i32, i32, i32, i32) {
    %c0_i32 = arith.constant 0 : i32
    %c0_i32_0 = arith.constant 0 : i32
    %c0_i32_1 = arith.constant 0 : i32
    %c0_i32_2 = arith.constant 0 : i32
    return %arg0, %c0_i32, %c0_i32_0, %c0_i32_1 : i32, i32, i32, i32
  }
  func.func @transform_1(%arg0: i32) -> (i32, i32) {
    %c0_i32 = arith.constant 0 : i32
    %c0_i32_0 = arith.constant 0 : i32
    %c0_i32_1 = arith.constant 0 : i32
    return %c0_i32, %c0_i32_0 : i32, i32
  }
  func.func @transform_2(%arg0: i32) -> (i32, i32) {
    %c0_i32 = arith.constant 0 : i32
    %c0_i32_0 = arith.constant 0 : i32
    %c0_i32_1 = arith.constant 0 : i32
    return %c0_i32, %c0_i32_0 : i32, i32
  }
  func.func @transform_3(%arg0: i32) -> (i32, i32) {
    %c0_i32 = arith.constant 0 : i32
    %c0_i32_0 = arith.constant 0 : i32
    %c0_i32_1 = arith.constant 0 : i32
    return %c0_i32, %c0_i32_0 : i32, i32
  }
  func.func @transform_4(%arg0: i32) -> (i32, i32, i32, i32) {
    %c0_i32 = arith.constant 0 : i32
    %c0_i32_0 = arith.constant 0 : i32
    %c0_i32_1 = arith.constant 0 : i32
    %c0_i32_2 = arith.constant 0 : i32
    return %arg0, %c0_i32, %c0_i32_0, %c0_i32_1 : i32, i32, i32, i32
  }
}

module attributes {stable_mosaic.version = 11 : i64} {
  func.func @_conv_s2_kernel(%arg0: i32, %arg1: memref<4x5x5x8xbf16, #tpu.memory_space<vmem>>, %arg2: memref<128x16xbf16, #tpu.memory_space<vmem>>, %arg3: memref<1x16xf32, #tpu.memory_space<vmem>>, %arg4: memref<1x16xf32, #tpu.memory_space<vmem>>, %arg5: memref<1x4x4x16xbf16, #tpu.memory_space<vmem>>) attributes {dimension_semantics = [#tpu.dimension_semantics<parallel>], iteration_bounds = array<i64: 2>, scalar_prefetch = 0 : i64, scratch_operands = 0 : i64, tpu.core_type = #tpu.core_type<tc>, window_params = [{transform_indices = @transform_0, window_bounds = array<i64: 4, 5, 5, 8>}, {pipeline_mode = #tpu.pipeline_mode<synchronous>, transform_indices = @transform_1, window_bounds = array<i64: 128, 16>}, {pipeline_mode = #tpu.pipeline_mode<synchronous>, transform_indices = @transform_2, window_bounds = array<i64: 1, 16>}, {pipeline_mode = #tpu.pipeline_mode<synchronous>, transform_indices = @transform_3, window_bounds = array<i64: 1, 16>}, {transform_indices = @transform_4, window_bounds = array<i64: 1, 4, 4, 16>}]} {
    %c0 = arith.constant 0 : index
    %c0_0 = arith.constant 0 : index
    %c0_1 = arith.constant 0 : index
    %c0_2 = arith.constant 0 : index
    %0 = vector.load %arg1[%c0, %c0_0, %c0_1, %c0_2] : memref<4x5x5x8xbf16, #tpu.memory_space<vmem>>, vector<1x4x4x8xbf16>
    %1 = vector.shape_cast %0 : vector<1x4x4x8xbf16> to vector<4x4x8xbf16>
    %2 = vector.shape_cast %1 : vector<4x4x8xbf16> to vector<16x8xbf16>
    %c1 = arith.constant 1 : index
    %c0_3 = arith.constant 0 : index
    %c0_4 = arith.constant 0 : index
    %c0_5 = arith.constant 0 : index
    %3 = vector.load %arg1[%c1, %c0_3, %c0_4, %c0_5] : memref<4x5x5x8xbf16, #tpu.memory_space<vmem>>, vector<1x4x4x8xbf16>
    %4 = vector.shape_cast %3 : vector<1x4x4x8xbf16> to vector<4x4x8xbf16>
    %5 = vector.shape_cast %4 : vector<4x4x8xbf16> to vector<16x8xbf16>
    %c0_6 = arith.constant 0 : index
    %c0_7 = arith.constant 0 : index
    %c1_8 = arith.constant 1 : index
    %c0_9 = arith.constant 0 : index
    %6 = vector.load %arg1[%c0_6, %c0_7, %c1_8, %c0_9] : memref<4x5x5x8xbf16, #tpu.memory_space<vmem>>, vector<1x4x4x8xbf16>
    %7 = vector.shape_cast %6 : vector<1x4x4x8xbf16> to vector<4x4x8xbf16>
    %8 = vector.shape_cast %7 : vector<4x4x8xbf16> to vector<16x8xbf16>
    %c1_10 = arith.constant 1 : index
    %c0_11 = arith.constant 0 : index
    %c1_12 = arith.constant 1 : index
    %c0_13 = arith.constant 0 : index
    %9 = vector.load %arg1[%c1_10, %c0_11, %c1_12, %c0_13] : memref<4x5x5x8xbf16, #tpu.memory_space<vmem>>, vector<1x4x4x8xbf16>
    %10 = vector.shape_cast %9 : vector<1x4x4x8xbf16> to vector<4x4x8xbf16>
    %11 = vector.shape_cast %10 : vector<4x4x8xbf16> to vector<16x8xbf16>
    %c2 = arith.constant 2 : index
    %c0_14 = arith.constant 0 : index
    %c0_15 = arith.constant 0 : index
    %c0_16 = arith.constant 0 : index
    %12 = vector.load %arg1[%c2, %c0_14, %c0_15, %c0_16] : memref<4x5x5x8xbf16, #tpu.memory_space<vmem>>, vector<1x4x4x8xbf16>
    %13 = vector.shape_cast %12 : vector<1x4x4x8xbf16> to vector<4x4x8xbf16>
    %14 = vector.shape_cast %13 : vector<4x4x8xbf16> to vector<16x8xbf16>
    %c3 = arith.constant 3 : index
    %c0_17 = arith.constant 0 : index
    %c0_18 = arith.constant 0 : index
    %c0_19 = arith.constant 0 : index
    %15 = vector.load %arg1[%c3, %c0_17, %c0_18, %c0_19] : memref<4x5x5x8xbf16, #tpu.memory_space<vmem>>, vector<1x4x4x8xbf16>
    %16 = vector.shape_cast %15 : vector<1x4x4x8xbf16> to vector<4x4x8xbf16>
    %17 = vector.shape_cast %16 : vector<4x4x8xbf16> to vector<16x8xbf16>
    %c2_20 = arith.constant 2 : index
    %c0_21 = arith.constant 0 : index
    %c1_22 = arith.constant 1 : index
    %c0_23 = arith.constant 0 : index
    %18 = vector.load %arg1[%c2_20, %c0_21, %c1_22, %c0_23] : memref<4x5x5x8xbf16, #tpu.memory_space<vmem>>, vector<1x4x4x8xbf16>
    %19 = vector.shape_cast %18 : vector<1x4x4x8xbf16> to vector<4x4x8xbf16>
    %20 = vector.shape_cast %19 : vector<4x4x8xbf16> to vector<16x8xbf16>
    %c3_24 = arith.constant 3 : index
    %c0_25 = arith.constant 0 : index
    %c1_26 = arith.constant 1 : index
    %c0_27 = arith.constant 0 : index
    %21 = vector.load %arg1[%c3_24, %c0_25, %c1_26, %c0_27] : memref<4x5x5x8xbf16, #tpu.memory_space<vmem>>, vector<1x4x4x8xbf16>
    %22 = vector.shape_cast %21 : vector<1x4x4x8xbf16> to vector<4x4x8xbf16>
    %23 = vector.shape_cast %22 : vector<4x4x8xbf16> to vector<16x8xbf16>
    %c0_28 = arith.constant 0 : index
    %c1_29 = arith.constant 1 : index
    %c0_30 = arith.constant 0 : index
    %c0_31 = arith.constant 0 : index
    %24 = vector.load %arg1[%c0_28, %c1_29, %c0_30, %c0_31] : memref<4x5x5x8xbf16, #tpu.memory_space<vmem>>, vector<1x4x4x8xbf16>
    %25 = vector.shape_cast %24 : vector<1x4x4x8xbf16> to vector<4x4x8xbf16>
    %26 = vector.shape_cast %25 : vector<4x4x8xbf16> to vector<16x8xbf16>
    %c1_32 = arith.constant 1 : index
    %c1_33 = arith.constant 1 : index
    %c0_34 = arith.constant 0 : index
    %c0_35 = arith.constant 0 : index
    %27 = vector.load %arg1[%c1_32, %c1_33, %c0_34, %c0_35] : memref<4x5x5x8xbf16, #tpu.memory_space<vmem>>, vector<1x4x4x8xbf16>
    %28 = vector.shape_cast %27 : vector<1x4x4x8xbf16> to vector<4x4x8xbf16>
    %29 = vector.shape_cast %28 : vector<4x4x8xbf16> to vector<16x8xbf16>
    %c0_36 = arith.constant 0 : index
    %c1_37 = arith.constant 1 : index
    %c1_38 = arith.constant 1 : index
    %c0_39 = arith.constant 0 : index
    %30 = vector.load %arg1[%c0_36, %c1_37, %c1_38, %c0_39] : memref<4x5x5x8xbf16, #tpu.memory_space<vmem>>, vector<1x4x4x8xbf16>
    %31 = vector.shape_cast %30 : vector<1x4x4x8xbf16> to vector<4x4x8xbf16>
    %32 = vector.shape_cast %31 : vector<4x4x8xbf16> to vector<16x8xbf16>
    %c1_40 = arith.constant 1 : index
    %c1_41 = arith.constant 1 : index
    %c1_42 = arith.constant 1 : index
    %c0_43 = arith.constant 0 : index
    %33 = vector.load %arg1[%c1_40, %c1_41, %c1_42, %c0_43] : memref<4x5x5x8xbf16, #tpu.memory_space<vmem>>, vector<1x4x4x8xbf16>
    %34 = vector.shape_cast %33 : vector<1x4x4x8xbf16> to vector<4x4x8xbf16>
    %35 = vector.shape_cast %34 : vector<4x4x8xbf16> to vector<16x8xbf16>
    %c2_44 = arith.constant 2 : index
    %c1_45 = arith.constant 1 : index
    %c0_46 = arith.constant 0 : index
    %c0_47 = arith.constant 0 : index
    %36 = vector.load %arg1[%c2_44, %c1_45, %c0_46, %c0_47] : memref<4x5x5x8xbf16, #tpu.memory_space<vmem>>, vector<1x4x4x8xbf16>
    %37 = vector.shape_cast %36 : vector<1x4x4x8xbf16> to vector<4x4x8xbf16>
    %38 = vector.shape_cast %37 : vector<4x4x8xbf16> to vector<16x8xbf16>
    %c3_48 = arith.constant 3 : index
    %c1_49 = arith.constant 1 : index
    %c0_50 = arith.constant 0 : index
    %c0_51 = arith.constant 0 : index
    %39 = vector.load %arg1[%c3_48, %c1_49, %c0_50, %c0_51] : memref<4x5x5x8xbf16, #tpu.memory_space<vmem>>, vector<1x4x4x8xbf16>
    %40 = vector.shape_cast %39 : vector<1x4x4x8xbf16> to vector<4x4x8xbf16>
    %41 = vector.shape_cast %40 : vector<4x4x8xbf16> to vector<16x8xbf16>
    %c2_52 = arith.constant 2 : index
    %c1_53 = arith.constant 1 : index
    %c1_54 = arith.constant 1 : index
    %c0_55 = arith.constant 0 : index
    %42 = vector.load %arg1[%c2_52, %c1_53, %c1_54, %c0_55] : memref<4x5x5x8xbf16, #tpu.memory_space<vmem>>, vector<1x4x4x8xbf16>
    %43 = vector.shape_cast %42 : vector<1x4x4x8xbf16> to vector<4x4x8xbf16>
    %44 = vector.shape_cast %43 : vector<4x4x8xbf16> to vector<16x8xbf16>
    %c3_56 = arith.constant 3 : index
    %c1_57 = arith.constant 1 : index
    %c1_58 = arith.constant 1 : index
    %c0_59 = arith.constant 0 : index
    %45 = vector.load %arg1[%c3_56, %c1_57, %c1_58, %c0_59] : memref<4x5x5x8xbf16, #tpu.memory_space<vmem>>, vector<1x4x4x8xbf16>
    %46 = vector.shape_cast %45 : vector<1x4x4x8xbf16> to vector<4x4x8xbf16>
    %47 = vector.shape_cast %46 : vector<4x4x8xbf16> to vector<16x8xbf16>
    %48 = tpu.concatenate %2, %5, %8, %11, %14, %17, %20, %23, %26, %29, %32, %35, %38, %41, %44, %47 in 1 : vector<16x8xbf16>, vector<16x8xbf16>, vector<16x8xbf16>, vector<16x8xbf16>, vector<16x8xbf16>, vector<16x8xbf16>, vector<16x8xbf16>, vector<16x8xbf16>, vector<16x8xbf16>, vector<16x8xbf16>, vector<16x8xbf16>, vector<16x8xbf16>, vector<16x8xbf16>, vector<16x8xbf16>, vector<16x8xbf16>, vector<16x8xbf16> -> vector<16x128xbf16>
    %c0_60 = arith.constant 0 : index
    %c0_61 = arith.constant 0 : index
    %49 = vector.load %arg2[%c0_60, %c0_61] : memref<128x16xbf16, #tpu.memory_space<vmem>>, vector<128x16xbf16>
    %cst = arith.constant dense<0.000000e+00> : vector<16x16xf32>
    %50 = tpu.matmul %48, %49, %cst {dimension_numbers = #tpu.dot_dimension_numbers<[1], [0], [0], [1], [0, 0, 1, 1], [], []>} : vector<16x128xbf16>, vector<128x16xbf16>, vector<16x16xf32> -> vector<16x16xf32>
    %c0_62 = arith.constant 0 : index
    %c0_63 = arith.constant 0 : index
    %51 = vector.load %arg3[%c0_62, %c0_63] : memref<1x16xf32, #tpu.memory_space<vmem>>, vector<1x16xf32>
    %52 = vector.broadcast %51 : vector<1x16xf32> to vector<16x16xf32>
    %53 = arith.mulf %50, %52 : vector<16x16xf32>
    %c0_64 = arith.constant 0 : index
    %c0_65 = arith.constant 0 : index
    %54 = vector.load %arg4[%c0_64, %c0_65] : memref<1x16xf32, #tpu.memory_space<vmem>>, vector<1x16xf32>
    %55 = vector.broadcast %54 : vector<1x16xf32> to vector<16x16xf32>
    %56 = arith.addf %53, %55 : vector<16x16xf32>
    %cst_66 = arith.constant 2.000000e-01 : f32
    %57 = vector.broadcast %cst_66 : f32 to vector<16x16xf32>
    %58 = arith.mulf %57, %56 : vector<16x16xf32>
    %59 = arith.maximumf %56, %58 : vector<16x16xf32>
    %60 = vector.shape_cast %59 : vector<16x16xf32> to vector<1x4x4x16xf32>
    %61 = arith.truncf %60 : vector<1x4x4x16xf32> to vector<1x4x4x16xbf16>
    %c0_67 = arith.constant 0 : index
    %c0_68 = arith.constant 0 : index
    %c0_69 = arith.constant 0 : index
    %c0_70 = arith.constant 0 : index
    %62 = vector.load %arg5[%c0_67, %c0_68, %c0_69, %c0_70] : memref<1x4x4x16xbf16, #tpu.memory_space<vmem>>, vector<1x4x4x16xbf16>
    tpu.vector_store %arg5[%c0_67, %c0_68, %c0_69, %c0_70], %61 {strides = array<i32>} : memref<1x4x4x16xbf16, #tpu.memory_space<vmem>>, vector<1x4x4x16xbf16>,
    return
  }
  func.func @transform_0(%arg0: i32) -> (i32, i32, i32, i32) {
    %c0_i32 = arith.constant 0 : i32
    %c0_i32_0 = arith.constant 0 : i32
    %c0_i32_1 = arith.constant 0 : i32
    %c0_i32_2 = arith.constant 0 : i32
    return %arg0, %c0_i32, %c0_i32_0, %c0_i32_1 : i32, i32, i32, i32
  }
  func.func @transform_1(%arg0: i32) -> (i32, i32) {
    %c0_i32 = arith.constant 0 : i32
    %c0_i32_0 = arith.constant 0 : i32
    %c0_i32_1 = arith.constant 0 : i32
    return %c0_i32, %c0_i32_0 : i32, i32
  }
  func.func @transform_2(%arg0: i32) -> (i32, i32) {
    %c0_i32 = arith.constant 0 : i32
    %c0_i32_0 = arith.constant 0 : i32
    %c0_i32_1 = arith.constant 0 : i32
    return %c0_i32, %c0_i32_0 : i32, i32
  }
  func.func @transform_3(%arg0: i32) -> (i32, i32) {
    %c0_i32 = arith.constant 0 : i32
    %c0_i32_0 = arith.constant 0 : i32
    %c0_i32_1 = arith.constant 0 : i32
    return %c0_i32, %c0_i32_0 : i32, i32
  }
  func.func @transform_4(%arg0: i32) -> (i32, i32, i32, i32) {
    %c0_i32 = arith.constant 0 : i32
    %c0_i32_0 = arith.constant 0 : i32
    %c0_i32_1 = arith.constant 0 : i32
    %c0_i32_2 = arith.constant 0 : i32
    return %arg0, %c0_i32, %c0_i32_0, %c0_i32_1 : i32, i32, i32, i32
  }
}

module attributes {stable_mosaic.version = 11 : i64} {
  func.func @_final_mean_kernel(%arg0: i32, %arg1: memref<2x256xbf16, #tpu.memory_space<vmem>>, %arg2: memref<256x1xbf16, #tpu.memory_space<vmem>>, %arg3: memref<1x1xf32, #tpu.memory_space<vmem>>) attributes {dimension_semantics = [#tpu.dimension_semantics<arbitrary>], iteration_bounds = array<i64: 1>, scalar_prefetch = 0 : i64, scratch_operands = 0 : i64, tpu.core_type = #tpu.core_type<tc>, window_params = [{pipeline_mode = #tpu.pipeline_mode<synchronous>, transform_indices = @transform_0, window_bounds = array<i64: 2, 256>}, {pipeline_mode = #tpu.pipeline_mode<synchronous>, transform_indices = @transform_1, window_bounds = array<i64: 256, 1>}, {pipeline_mode = #tpu.pipeline_mode<synchronous>, transform_indices = @transform_2, window_bounds = array<i64: 1, 1>}]} {
    %c0 = arith.constant 0 : index
    %c0_0 = arith.constant 0 : index
    %0 = vector.load %arg1[%c0, %c0_0] : memref<2x256xbf16, #tpu.memory_space<vmem>>, vector<2x256xbf16>
    %c0_1 = arith.constant 0 : index
    %c0_2 = arith.constant 0 : index
    %1 = vector.load %arg2[%c0_1, %c0_2] : memref<256x1xbf16, #tpu.memory_space<vmem>>, vector<256x1xbf16>
    %cst = arith.constant dense<0.000000e+00> : vector<2x1xf32>
    %2 = tpu.matmul %0, %1, %cst {dimension_numbers = #tpu.dot_dimension_numbers<[1], [0], [0], [1], [0, 0, 1, 1], [], []>} : vector<2x256xbf16>, vector<256x1xbf16>, vector<2x1xf32> -> vector<2x1xf32>
    %cst_3 = arith.constant dense<0.000000e+00> : vector<1xf32>
    %3 = vector.multi_reduction <add>, %2, %cst_3 [0] : vector<2x1xf32> to vector<1xf32>
    %4 = vector.shape_cast %3 : vector<1xf32> to vector<1x1xf32>
    %cst_4 = arith.constant 2.000000e+00 : f32
    %5 = vector.broadcast %cst_4 : f32 to vector<1x1xf32>
    %6 = arith.divf %4, %5 : vector<1x1xf32>
    %c0_5 = arith.constant 0 : index
    %c0_6 = arith.constant 0 : index
    %7 = vector.load %arg3[%c0_5, %c0_6] : memref<1x1xf32, #tpu.memory_space<vmem>>, vector<1x1xf32>
    tpu.vector_store %arg3[%c0_5, %c0_6], %6 {strides = array<i32>} : memref<1x1xf32, #tpu.memory_space<vmem>>, vector<1x1xf32>,
    return
  }
  func.func @transform_0(%arg0: i32) -> (i32, i32) {
    %c0_i32 = arith.constant 0 : i32
    %c0_i32_0 = arith.constant 0 : i32
    %c0_i32_1 = arith.constant 0 : i32
    return %c0_i32, %c0_i32_0 : i32, i32
  }
  func.func @transform_1(%arg0: i32) -> (i32, i32) {
    %c0_i32 = arith.constant 0 : i32
    %c0_i32_0 = arith.constant 0 : i32
    %c0_i32_1 = arith.constant 0 : i32
    return %c0_i32, %c0_i32_0 : i32, i32
  }
  func.func @transform_2(%arg0: i32) -> (i32, i32) {
    %c0_i32 = arith.constant 0 : i32
    %c0_i32_0 = arith.constant 0 : i32
    %c0_i32_1 = arith.constant 0 : i32
    return %c0_i32, %c0_i32_0 : i32, i32
  }
}

</mosaic_0001>

<llo_original>
// kernel: dcgan_d_forward.5
$region0: #{dcgan_d_forward.5}
  #allocation0 [shape = 'u32[]', space=smem, size = 0x4, offset = 0x4, fixed_abs, tag = 'smem constant byte address 0x4 - core index']
  #allocation1 [shape = 'u32[72,128]{1,0:T(1,128)}', space=vmem, size = 0x9000, scoped, tag = 'internal scratch']
  %s0 = inlined_call_operand.vmem [shape: bf16[2,256], index: 0, kind: input, shape index: {}]
  %s1 = inlined_call_operand.vmem [shape: bf16[256,1], index: 1, kind: input, shape index: {}]
  %s2 = inlined_call_operand.hbm [shape: f32[1,1], index: 2, kind: output, shape index: {}]
  %s3 = sld [smem:[#allocation0]]
  $region18: #{dcgan_d_forward.5} parent=0
    _
  %s5 = ssub.s32 1, %s3
  %s6 = scalar_select 0, %s5, %s3
  $region1: #{dcgan_d_forward.5} parent=0
    #allocation2 [shape = 'u8[512]{0}', space=vmem, size = 0x400, scoped, tag = 'output window, operand 0, single buffered']
    #allocation3 [shape = 's32[1]{0}', space=sflag, size = 0x4, scoped, tag = 'scoped memory for dcgan_d_forward.5']
    %7 = vsyncpa [#allocation3], 0
    // Predicated region
    $region2: #{dcgan_d_forward.5} parent=1 // pred_check
      _
    $region3: #{dcgan_d_forward.5} parent=1 // pred_check_branch
      %9 = sbr.rel (0) target = $region5
    $region4: #{dcgan_d_forward.5} parent=1 // pred_region
      _
    $region5: #{dcgan_d_forward.5} parent=1 // pred_fallthru
      _
    // Predicated region
    $region6: #{dcgan_d_forward.5} parent=1 // pred_check
      _
    $region7: #{dcgan_d_forward.5} parent=1 // pred_check_branch
      %11 = sbr.rel (0) target = $region9
    $region8: #{dcgan_d_forward.5} parent=1 // pred_region
      _
    $region9: #{dcgan_d_forward.5} parent=1 // pred_fallthru
      _
    %v12 = vld [vmem:[%s0] sm:$0x3]
    %v13 = vld [vmem:[%s1] sm:$0xf]
    %v14 = vld [vmem:[%s1 + $0x4] sm:$0xf]
    %v15 = vld [vmem:[%s1 + $0x8] sm:$0xf]
    %v16 = vld [vmem:[%s1 + $0xc] sm:$0xf]
    %v17 = vld [vmem:[%s1 + $0x10] sm:$0xf]
    %v18 = vld [vmem:[%s1 + $0x14] sm:$0xf]
    %v19 = vld [vmem:[%s1 + $0x18] sm:$0xf]
    %v20 = vld [vmem:[%s1 + $0x1c] sm:$0xf]
    %v21 = vld [vmem:[%s1 + $0x20] sm:$0xf]
    %v22 = vld [vmem:[%s1 + $0x24] sm:$0xf]
    %v23 = vld [vmem:[%s1 + $0x28] sm:$0xf]
    %v24 = vld [vmem:[%s1 + $0x2c] sm:$0xf]
    %v25 = vld [vmem:[%s1 + $0x30] sm:$0xf]
    %v26 = vld [vmem:[%s1 + $0x34] sm:$0xf]
    %v27 = vld [vmem:[%s1 + $0x38] sm:$0xf]
    %v28 = vld [vmem:[%s1 + $0x3c] sm:$0xf]
    %v29 = vld [vmem:[%s1 + $0x40] sm:$0xf]
    %v30 = vld [vmem:[%s1 + $0x44] sm:$0xf]
    %v31 = vld [vmem:[%s1 + $0x48] sm:$0xf]
    %v32 = vld [vmem:[%s1 + $0x4c] sm:$0xf]
    %v33 = vld [vmem:[%s1 + $0x50] sm:$0xf]
    %v34 = vld [vmem:[%s1 + $0x54] sm:$0xf]
    %v35 = vld [vmem:[%s1 + $0x58] sm:$0xf]
    %v36 = vld [vmem:[%s1 + $0x5c] sm:$0xf]
    %v37 = vld [vmem:[%s1 + $0x60] sm:$0xf]
    %v38 = vld [vmem:[%s1 + $0x64] sm:$0xf]
    %v39 = vld [vmem:[%s1 + $0x68] sm:$0xf]
    %v40 = vld [vmem:[%s1 + $0x6c] sm:$0xf]
    %v41 = vld [vmem:[%s1 + $0x70] sm:$0xf]
    %v42 = vld [vmem:[%s1 + $0x74] sm:$0xf]
    %v43 = vld [vmem:[%s1 + $0x78] sm:$0xf]
    %v44 = vld [vmem:[%s1 + $0x7c] sm:$0xf]
    %46 = vst [vmem:[#allocation1] ss:$9 sm:$0xff] %v12
    %v47 = vld [vmem:[#allocation1] sm:$0xff]
    %v48 = vld [vmem:[#allocation1 + $0x9] sm:$0xff]
    %v83 = vunpack.c.l.b16 %v13
    %v84 = vunpack.c.l.b16 %v14
    %v85 = vunpack.c.l.b16 %v15
    %v86 = vunpack.c.l.b16 %v16
    %v87 = vunpack.c.l.b16 %v17
    %v88 = vunpack.c.l.b16 %v18
    %v89 = vunpack.c.l.b16 %v19
    %v90 = vunpack.c.l.b16 %v20
    %v91 = vunpack.c.l.b16 %v21
    %v92 = vunpack.c.l.b16 %v22
    %v93 = vunpack.c.l.b16 %v23
    %v94 = vunpack.c.l.b16 %v24
    %v95 = vunpack.c.l.b16 %v25
    %v96 = vunpack.c.l.b16 %v26
    %v97 = vunpack.c.l.b16 %v27
    %v98 = vunpack.c.l.b16 %v28
    %v99 = vunpack.c.l.b16 %v29
    %v100 = vunpack.c.l.b16 %v30
    %v101 = vunpack.c.l.b16 %v31
    %v102 = vunpack.c.l.b16 %v32
    %v103 = vunpack.c.l.b16 %v33
    %v104 = vunpack.c.l.b16 %v34
    %v105 = vunpack.c.l.b16 %v35
    %v106 = vunpack.c.l.b16 %v36
    %v107 = vunpack.c.l.b16 %v37
    %v108 = vunpack.c.l.b16 %v38
    %v109 = vunpack.c.l.b16 %v39
    %v110 = vunpack.c.l.b16 %v40
    %v111 = vunpack.c.l.b16 %v41
    %v112 = vunpack.c.l.b16 %v42
    %v113 = vunpack.c.l.b16 %v43
    %v114 = vunpack.c.l.b16 %v44
    %v115 = vpack.c.b16 %v84, %v83
    %v116 = vpack.c.b16 %v86, %v85
    %v117 = vpack.c.b16 %v88, %v87
    %v118 = vpack.c.b16 %v90, %v89
    %v119 = vpack.c.b16 %v92, %v91
    %v120 = vpack.c.b16 %v94, %v93
    %v121 = vpack.c.b16 %v96, %v95
    %v122 = vpack.c.b16 %v98, %v97
    %v123 = vpack.c.b16 %v100, %v99
    %v124 = vpack.c.b16 %v102, %v101
    %v125 = vpack.c.b16 %v104, %v103
    %v126 = vpack.c.b16 %v106, %v105
    %v127 = vpack.c.b16 %v108, %v107
    %v128 = vpack.c.b16 %v110, %v109
    %v129 = vpack.c.b16 %v112, %v111
    %v130 = vpack.c.b16 %v114, %v113
    %147 = vmatpush.bf16.msra.mxu0 %v122
    %148 = vmatpush.bf16.msra.mxu0 %v121
    %149 = vmatpush.bf16.msra.mxu0 %v120
    %150 = vmatpush.bf16.msra.mxu0 %v119
    %151 = vmatpush.bf16.msra.mxu0 %v118
    %152 = vmatpush.bf16.msra.mxu0 %v117
    %153 = vmatpush.bf16.msra.mxu0 %v116
    %154 = vmatpush.bf16.msra.mxu0 %v115
    %155 = vmatmul.bf16.gmra.mxu0 %v47
    %v156 = vpop.f32.mrf.mxu0
    %v157 = vadd.f32 0.0, %v156
    %v158 = vpop.f32.mrf.mxu0
    %159 = vdwg.mxu0
    %160 = vmatpush.bf16.msra.mxu0 %v130
    %161 = vmatpush.bf16.msra.mxu0 %v129
    %162 = vmatpush.bf16.msra.mxu0 %v128
    %163 = vmatpush.bf16.msra.mxu0 %v127
    %164 = vmatpush.bf16.msra.mxu0 %v126
    %165 = vmatpush.bf16.msra.mxu0 %v125
    %166 = vmatpush.bf16.msra.mxu0 %v124
    %167 = vmatpush.bf16.msra.mxu0 %v123
    %168 = vmatmul.bf16.gmra.mxu0 %v48
    %v169 = vpop.f32.mrf.mxu0
    %v170 = vadd.f32 %v157, %v169
    %v171 = vpop.f32.mrf.mxu0
    %172 = vdwg.mxu0
    %vm173 = vcmask 1024
    %v174 = vsel %vm173, %v170, 0.0
    %v175 = vrot.slane %v174, 4
    %v176 = vadd.f32 %v174, %v175
    %v177 = vrot.slane %v176, 2
    %v178 = vadd.f32 %v176, %v177
    %v179 = vrot.slane %v178, 1
    %v180 = vadd.f32 %v178, %v179
    %v181 = vrcp.pop 2.0
    %v182 = vmul.f32 2.0, %v181
    %v183 = vsub.f32 1.0, %v182
    %v184 = vmul.f32 %v181, %v183
    %v185 = vadd.f32 %v181, %v184
    %vm186 = vweird.f32 %v181
    %v187 = vsel %vm186, %v181, %v185
    %v188 = vmul.f32 %v180, %v187
    %vm189 = vcmask 0
    %190 = vst.msk [vmem:[#allocation2] sm:$0x1] %vm189, %v188
    // Predicated region
    $region10: #{dcgan_d_forward.5} parent=1 // pred_check
      _
    $region11: #{dcgan_d_forward.5} parent=1 // pred_check_branch
      %192 = sbr.rel (0) target = $region13
    $region12: #{dcgan_d_forward.5} parent=1 // pred_region
      %194 = vsyncadd [#allocation3], 0
      %s196 = sshll.u32 [#allocation2], 4
      %s197 = int_to_ptr.vmem [resolvable:$true] %s196
      %s198 = sshll.u32 %s2, 4
      %s199 = int_to_ptr.hbm [resolvable:$true] %s198
      %201 = dma.vmem_to_hbm [thread:$0]  %s197, 16, %s199, [#allocation3]
    $region13: #{dcgan_d_forward.5} parent=1 // pred_fallthru
      _
    // Predicated region
    $region14: #{dcgan_d_forward.5} parent=1 // pred_check
      _
    $region15: #{dcgan_d_forward.5} parent=1 // pred_check_branch
      %203 = sbr.rel (0) target = $region17
    $region16: #{dcgan_d_forward.5} parent=1 // pred_region
      %205 = dma.done [#allocation3], 16
    $region17: #{dcgan_d_forward.5} parent=1 // pred_fallthru
      _
    %206 = vsyncpa [#allocation3], 1

// kernel: dcgan_d_forward.3
$region0: #{dcgan_d_forward.3}
  #allocation0 [shape = 'u32[]', space=smem, size = 0x4, offset = 0x4, fixed_abs, tag = 'smem constant byte address 0x4 - core index']
  #allocation1 [shape = 'u32[72,128]{1,0:T(1,128)}', space=vmem, size = 0x9000, scoped, tag = 'internal scratch']
  %s0 = inlined_call_operand.vmem [shape: bf16[8,9,9,3], index: 0, kind: input, shape index: {}]
  %s1 = inlined_call_operand.vmem [shape: bf16[48,8], index: 1, kind: input, shape index: {}]
  %s2 = inlined_call_operand.vmem [shape: f32[1,8], index: 2, kind: input, shape index: {}]
  %s3 = inlined_call_operand.vmem [shape: f32[1,8], index: 3, kind: input, shape index: {}]
  %s4 = inlined_call_operand.vmem [shape: bf16[2,8,8,8], index: 4, kind: output, shape index: {}]
  %s5 = sld [smem:[#allocation0]]
  $region49: #{dcgan_d_forward.3} parent=0
    _
  %s7 = ssub.s32 1, %s5
  %s8 = scalar_select 0, %s7, %s5
  loop: start=0, step=1, limit=4
  $region2: #{dcgan_d_forward.3} parent=0 // loop_pre_header
    _
  $region3: #{dcgan_d_forward.3} parent=0 // loop_header
    %s10 = sphi 0, %s14
    %p11 = scmp.ge.s32.totalorder %s10, 4
    %s20 = sphi 0, %s22
    %s23 = sphi 0, %s20
    %s24 = sphi 0, %s23
    %s40 = sphi 0, %s24
    %s44 = sphi 0, %s44
    %s46 = sphi 0, %s44
    %s47 = sphi 0, %s46
    %s61 = sphi 0, %s47
    %s65 = sphi 0, %s65
    %s67 = sphi 0, %s65
    %s68 = sphi 0, %s67
    %s82 = sphi 0, %s68
    %s86 = sphi 0, %s86
    %s88 = sphi 0, %s86
    %s89 = sphi 0, %s88
    %s103 = sphi 0, %s89
    %s109 = sphi 0, %s111
    %s112 = sphi 0, %s109
    %s113 = sphi 0, %s112
    %s129 = sphi 0, %s113
  $region4: #{dcgan_d_forward.3} parent=0 // loop_header_branch
    %13 = sbr.rel (%p11) target = $region8
  $region5: #{dcgan_d_forward.3} parent=0 // loop_body
    %s15 = ssub.s32 %s10, 1
    %s16 = ssub.s32 %s10, 2
    %s17 = sadd.s32 %s10, 1
    %s18 = ssub.s32 %s10, %s17
    %p19 = scmp.eq.s32.totalorder %s18, 0
    %s21 = sadd.s32 %s20, 1
    %s22 = scalar_select %p19, %s20, %s21
    %p25 = pneg %p19
    %p26 = scmp.eq.s32.totalorder %s10, 1
    %p27 = por %p25, %p26
    %p28 = scmp.ne.s32.totalorder %s20, %s23
    %p29 = scmp.eq.s32.totalorder %s10, 0
    %p30 = por %p28, %p29
    %p31 = scmp.ne.s32.totalorder %s20, %s23
    %p32 = scmp.eq.s32.totalorder %s15, 1
    %p33 = por %p31, %p32
    %p34 = scmp.ne.s32.totalorder %s23, %s24
    %p35 = scmp.eq.s32.totalorder %s15, 0
    %p36 = por %p34, %p35
    %p37 = scmp.ne.s32.totalorder %s23, %s24
    %p38 = scmp.eq.s32.totalorder %s16, 1
    %p39 = por %p37, %p38
    %p41 = scmp.ne.s32.totalorder %s24, %s40
    %p42 = scmp.eq.s32.totalorder %s16, 0
    %p43 = por %p41, %p42
    %s45 = sadd.s32 %s44, 1
    %p48 = scmp.eq.s32.totalorder %s10, 1
    %p49 = scmp.ne.s32.totalorder %s44, %s46
    %p50 = scmp.eq.s32.totalorder %s10, 0
    %p51 = por %p49, %p50
    %p52 = scmp.ne.s32.totalorder %s44, %s46
    %p53 = scmp.eq.s32.totalorder %s15, 1
    %p54 = por %p52, %p53
    %p55 = scmp.ne.s32.totalorder %s46, %s47
    %p56 = scmp.eq.s32.totalorder %s15, 0
    %p57 = por %p55, %p56
    %p58 = scmp.ne.s32.totalorder %s46, %s47
    %p59 = scmp.eq.s32.totalorder %s16, 1
    %p60 = por %p58, %p59
    %p62 = scmp.ne.s32.totalorder %s47, %s61
    %p63 = scmp.eq.s32.totalorder %s16, 0
    %p64 = por %p62, %p63
    %s66 = sadd.s32 %s65, 1
    %p69 = scmp.eq.s32.totalorder %s10, 1
    %p70 = scmp.ne.s32.totalorder %s65, %s67
    %p71 = scmp.eq.s32.totalorder %s10, 0
    %p72 = por %p70, %p71
    %p73 = scmp.ne.s32.totalorder %s65, %s67
    %p74 = scmp.eq.s32.totalorder %s15, 1
    %p75 = por %p73, %p74
    %p76 = scmp.ne.s32.totalorder %s67, %s68
    %p77 = scmp.eq.s32.totalorder %s15, 0
    %p78 = por %p76, %p77
    %p79 = scmp.ne.s32.totalorder %s67, %s68
    %p80 = scmp.eq.s32.totalorder %s16, 1
    %p81 = por %p79, %p80
    %p83 = scmp.ne.s32.totalorder %s68, %s82
    %p84 = scmp.eq.s32.totalorder %s16, 0
    %p85 = por %p83, %p84
    %s87 = sadd.s32 %s86, 1
    %p90 = scmp.eq.s32.totalorder %s10, 1
    %p91 = scmp.ne.s32.totalorder %s86, %s88
    %p92 = scmp.eq.s32.totalorder %s10, 0
    %p93 = por %p91, %p92
    %p94 = scmp.ne.s32.totalorder %s86, %s88
    %p95 = scmp.eq.s32.totalorder %s15, 1
    %p96 = por %p94, %p95
    %p97 = scmp.ne.s32.totalorder %s88, %s89
    %p98 = scmp.eq.s32.totalorder %s15, 0
    %p99 = por %p97, %p98
    %p100 = scmp.ne.s32.totalorder %s88, %s89
    %p101 = scmp.eq.s32.totalorder %s16, 1
    %p102 = por %p100, %p101
    %p104 = scmp.ne.s32.totalorder %s89, %s103
    %p105 = scmp.eq.s32.totalorder %s16, 0
    %p106 = por %p104, %p105
    %s107 = ssub.s32 %s10, %s17
    %p108 = scmp.eq.s32.totalorder %s107, 0
    %s110 = sadd.s32 %s109, 1
    %s111 = scalar_select %p108, %s109, %s110
    %p114 = pneg %p108
    %p115 = scmp.eq.s32.totalorder %s10, 1
    %p116 = por %p114, %p115
    %p117 = scmp.ne.s32.totalorder %s109, %s112
    %p118 = scmp.eq.s32.totalorder %s10, 0
    %p119 = por %p117, %p118
    %p120 = scmp.ne.s32.totalorder %s109, %s112
    %p121 = scmp.eq.s32.totalorder %s15, 1
    %p122 = por %p120, %p121
    %p123 = scmp.ne.s32.totalorder %s112, %s113
    %p124 = scmp.eq.s32.totalorder %s15, 0
    %p125 = por %p123, %p124
    %p126 = scmp.ne.s32.totalorder %s112, %s113
    %p127 = scmp.eq.s32.totalorder %s16, 1
    %p128 = por %p126, %p127
    %p130 = scmp.ne.s32.totalorder %s113, %s129
    %p131 = scmp.eq.s32.totalorder %s16, 0
    %p132 = por %p130, %p131
    %p133 = scmp.le.s32.totalorder 1, %s10
    %p134 = scmp.lt.s32.totalorder %s10, 3
    %p135 = pnand %p133, %p134
    %p136 = pneg %p135
    // Predicated region
    $region9: #{dcgan_d_forward.3} parent=5 // pred_check
      _
    $region10: #{dcgan_d_forward.3} parent=5 // pred_check_branch
      %138 = sbr.rel (%p135) target = $region12
    $region11: #{dcgan_d_forward.3} parent=5 // pred_region
      %s139 = ssub.s32 %s10, 1
      // Predicated region
      $region13: #{dcgan_d_forward.3} parent=11 // pred_check
        %p140 = pneg %p57
      $region14: #{dcgan_d_forward.3} parent=11 // pred_check_branch
        %142 = sbr.rel (%p140) target = $region16
      $region15: #{dcgan_d_forward.3} parent=11 // pred_region
        _
      $region16: #{dcgan_d_forward.3} parent=11 // pred_fallthru
        _
      // Predicated region
      $region17: #{dcgan_d_forward.3} parent=11 // pred_check
        %p143 = pneg %p78
      $region18: #{dcgan_d_forward.3} parent=11 // pred_check_branch
        %145 = sbr.rel (%p143) target = $region20
      $region19: #{dcgan_d_forward.3} parent=11 // pred_region
        _
      $region20: #{dcgan_d_forward.3} parent=11 // pred_fallthru
        _
      // Predicated region
      $region21: #{dcgan_d_forward.3} parent=11 // pred_check
        %p146 = pneg %p99
      $region22: #{dcgan_d_forward.3} parent=11 // pred_check_branch
        %148 = sbr.rel (%p146) target = $region24
      $region23: #{dcgan_d_forward.3} parent=11 // pred_region
        _
      $region24: #{dcgan_d_forward.3} parent=11 // pred_fallthru
        _
    $region12: #{dcgan_d_forward.3} parent=5 // pred_fallthru
      _
    %p149 = scmp.lt.s32.totalorder %s10, 2
    // Predicated region
    $region25: #{dcgan_d_forward.3} parent=5 // pred_check
      %p150 = pneg %p149
    $region26: #{dcgan_d_forward.3} parent=5 // pred_check_branch
      %152 = sbr.rel (%p150) target = $region28
    $region27: #{dcgan_d_forward.3} parent=5 // pred_region
      // Predicated region
      $region29: #{dcgan_d_forward.3} parent=27 // pred_check
        %p153 = pneg %p30
      $region30: #{dcgan_d_forward.3} parent=27 // pred_check_branch
        %155 = sbr.rel (%p153) target = $region32
      $region31: #{dcgan_d_forward.3} parent=27 // pred_region
        %s156 = smul.u32 4, %s10
        %p157 = scmp.lt.s32.totalorder %s156, 7
        %s158 = scalar_select %p157, %s156, 7
        %s159 = smul.addr %s158, 18
        %s160 = smul.addr %s159, 4
        %s161 = scalar_lea.vmem %s0, %s160
        %s162 = smul.u32 4, %s10
      $region32: #{dcgan_d_forward.3} parent=27 // pred_fallthru
        _
    $region28: #{dcgan_d_forward.3} parent=5 // pred_fallthru
      _
    %p163 = scmp.le.s32.totalorder 1, %s10
    %p164 = scmp.lt.s32.totalorder %s10, 3
    %p165 = pnand %p163, %p164
    %p166 = pneg %p165
    // Predicated region
    $region33: #{dcgan_d_forward.3} parent=5 // pred_check
      _
    $region34: #{dcgan_d_forward.3} parent=5 // pred_check_branch
      %168 = sbr.rel (%p165) target = $region36
    $region35: #{dcgan_d_forward.3} parent=5 // pred_region
      %s169 = ssub.s32 %s10, 1
      %s170 = smul.u32 4, %s15
      %p171 = scmp.lt.s32.totalorder %s170, 7
      %s172 = scalar_select %p171, %s170, 7
      %s173 = smul.addr %s172, 18
      %s174 = smul.addr %s173, 4
      %s175 = scalar_lea.vmem %s0, %s174
      %p176 = pneg %p36
      %p177 = pneg %p33
      %p178 = pneg %p57
      %p179 = pneg %p54
      %p180 = pneg %p78
      %p181 = pneg %p75
      %p182 = pneg %p99
      %p183 = pneg %p96
      %p184 = pneg %p125
      %p185 = pneg %p122
      %p186 = scmp.lt.s32.totalorder %s15, 1
      %s187 = scalar_select %p186, %s15, 1
      %s188 = smul.addr %s187, 8
      %s189 = smul.addr %s188, 4
      %s190 = scalar_lea.vmem %s4, %s189
      %s191 = smul.u32 4, %s15
      %p192 = scmp.lt.s32.totalorder %s191, 7
      %s193 = scalar_select %p192, %s191, 7
      %s194 = smul.addr %s193, 18
      %s195 = smul.addr %s194, 4
      %s196 = scalar_lea.vmem %s0, %s195
      %s197 = smul.u32 4, %s15
      %p198 = scmp.lt.s32.totalorder %s15, 1
      %s199 = scalar_select %p198, %s15, 1
      %s200 = smul.addr %s199, 8
      %s201 = smul.addr %s200, 4
      %s202 = scalar_lea.vmem %s4, %s201
      %v204 = vld [vmem:[%s196] sm:$0xf]
      %v205 = vld [vmem:[%s196 + $0x8] sm:$0xf]
      %v206 = vld [vmem:[%s196 + $0x10] sm:$0xf]
      %v207 = vld [vmem:[%s196 + $0x18] sm:$0xf]
      %v208 = vld [vmem:[%s196 + $0x20] sm:$0xf]
      %v209 = vld [vmem:[%s196 + $0x28] sm:$0xf]
      %v210 = vld [vmem:[%s196 + $0x30] sm:$0xf]
      %v211 = vld [vmem:[%s196 + $0x38] sm:$0xf]
      %s212 = scalar_lea.vmem %s196, 72
      %v213 = vld [vmem:[%s212] sm:$0xf]
      %v214 = vld [vmem:[%s212 + $0x8] sm:$0xf]
      %v215 = vld [vmem:[%s212 + $0x10] sm:$0xf]
      %v216 = vld [vmem:[%s212 + $0x18] sm:$0xf]
      %v217 = vld [vmem:[%s212 + $0x20] sm:$0xf]
      %v218 = vld [vmem:[%s212 + $0x28] sm:$0xf]
      %v219 = vld [vmem:[%s212 + $0x30] sm:$0xf]
      %v220 = vld [vmem:[%s212 + $0x38] sm:$0xf]
      %v221 = vld [vmem:[%s196 + $0x4] sm:$0x1]
      %v222 = vld [vmem:[%s196 + $0xc] sm:$0x1]
      %v223 = vld [vmem:[%s196 + $0x14] sm:$0x1]
      %v224 = vld [vmem:[%s196 + $0x1c] sm:$0x1]
      %v225 = vld [vmem:[%s196 + $0x24] sm:$0x1]
      %v226 = vld [vmem:[%s196 + $0x2c] sm:$0x1]
      %v227 = vld [vmem:[%s196 + $0x34] sm:$0x1]
      %v228 = vld [vmem:[%s196 + $0x3c] sm:$0x1]
      %vm229 = vsmask.f32 3328
      %vm230 = vsmask.f32 7440
      %vm231 = vmor %vm229, %vm230
      %v233 = vshrl.u32 %v204, 16
      %v235 = vrot.slane %v233, 4
      %v236 = vshll.u32 %v204, 16
      %v238 = vrot.slane %v236, 5
      %v239 = vor.u32 %v235, %v238
      %v240 = vrot.slane %v239, 4
      %v242 = vshll.u32 %v221, 16
      %v244 = vrot.slane %v242, 5
      %v245 = vsel %vm231, %v240, %v244
      %v247 = vshrl.u32 %v205, 16
      %v249 = vrot.slane %v247, 4
      %v250 = vshll.u32 %v205, 16
      %v252 = vrot.slane %v250, 5
      %v253 = vor.u32 %v249, %v252
      %v254 = vrot.slane %v253, 4
      %v256 = vshll.u32 %v222, 16
      %v258 = vrot.slane %v256, 5
      %v259 = vsel %vm231, %v254, %v258
      %v261 = vshrl.u32 %v206, 16
      %v263 = vrot.slane %v261, 4
      %v264 = vshll.u32 %v206, 16
      %v266 = vrot.slane %v264, 5
      %v267 = vor.u32 %v263, %v266
      %v268 = vrot.slane %v267, 4
      %v270 = vshll.u32 %v223, 16
      %v272 = vrot.slane %v270, 5
      %v273 = vsel %vm231, %v268, %v272
      %v275 = vshrl.u32 %v207, 16
      %v277 = vrot.slane %v275, 4
      %v278 = vshll.u32 %v207, 16
      %v280 = vrot.slane %v278, 5
      %v281 = vor.u32 %v277, %v280
      %v282 = vrot.slane %v281, 4
      %v284 = vshll.u32 %v224, 16
      %v286 = vrot.slane %v284, 5
      %v287 = vsel %vm231, %v282, %v286
      %v289 = vshrl.u32 %v208, 16
      %v291 = vrot.slane %v289, 4
      %v292 = vshll.u32 %v208, 16
      %v294 = vrot.slane %v292, 5
      %v295 = vor.u32 %v291, %v294
      %v296 = vrot.slane %v295, 4
      %v298 = vshll.u32 %v225, 16
      %v300 = vrot.slane %v298, 5
      %v301 = vsel %vm231, %v296, %v300
      %v303 = vshrl.u32 %v209, 16
      %v305 = vrot.slane %v303, 4
      %v306 = vshll.u32 %v209, 16
      %v308 = vrot.slane %v306, 5
      %v309 = vor.u32 %v305, %v308
      %v310 = vrot.slane %v309, 4
      %v312 = vshll.u32 %v226, 16
      %v314 = vrot.slane %v312, 5
      %v315 = vsel %vm231, %v310, %v314
      %v317 = vshrl.u32 %v210, 16
      %v319 = vrot.slane %v317, 4
      %v320 = vshll.u32 %v210, 16
      %v322 = vrot.slane %v320, 5
      %v323 = vor.u32 %v319, %v322
      %v324 = vrot.slane %v323, 4
      %v326 = vshll.u32 %v227, 16
      %v328 = vrot.slane %v326, 5
      %v329 = vsel %vm231, %v324, %v328
      %v331 = vshrl.u32 %v211, 16
      %v333 = vrot.slane %v331, 4
      %v334 = vshll.u32 %v211, 16
      %v336 = vrot.slane %v334, 5
      %v337 = vor.u32 %v333, %v336
      %v338 = vrot.slane %v337, 4
      %v340 = vshll.u32 %v228, 16
      %v342 = vrot.slane %v340, 5
      %v343 = vsel %vm231, %v338, %v342
      %v344 = vld [vmem:[%s212 + $0x4] sm:$0x1]
      %v345 = vld [vmem:[%s212 + $0xc] sm:$0x1]
      %v346 = vld [vmem:[%s212 + $0x14] sm:$0x1]
      %v347 = vld [vmem:[%s212 + $0x1c] sm:$0x1]
      %v348 = vld [vmem:[%s212 + $0x24] sm:$0x1]
      %v349 = vld [vmem:[%s212 + $0x2c] sm:$0x1]
      %v350 = vld [vmem:[%s212 + $0x34] sm:$0x1]
      %v351 = vld [vmem:[%s212 + $0x3c] sm:$0x1]
      %v353 = vshrl.u32 %v213, 16
      %v355 = vrot.slane %v353, 4
      %v356 = vshll.u32 %v213, 16
      %v358 = vrot.slane %v356, 5
      %v359 = vor.u32 %v355, %v358
      %v360 = vrot.slane %v359, 4
      %v362 = vshll.u32 %v344, 16
      %v364 = vrot.slane %v362, 5
      %v365 = vsel %vm231, %v360, %v364
      %v367 = vshrl.u32 %v214, 16
      %v369 = vrot.slane %v367, 4
      %v370 = vshll.u32 %v214, 16
      %v372 = vrot.slane %v370, 5
      %v373 = vor.u32 %v369, %v372
      %v374 = vrot.slane %v373, 4
      %v376 = vshll.u32 %v345, 16
      %v378 = vrot.slane %v376, 5
      %v379 = vsel %vm231, %v374, %v378
      %v381 = vshrl.u32 %v215, 16
      %v383 = vrot.slane %v381, 4
      %v384 = vshll.u32 %v215, 16
      %v386 = vrot.slane %v384, 5
      %v387 = vor.u32 %v383, %v386
      %v388 = vrot.slane %v387, 4
      %v390 = vshll.u32 %v346, 16
      %v392 = vrot.slane %v390, 5
      %v393 = vsel %vm231, %v388, %v392
      %v395 = vshrl.u32 %v216, 16
      %v397 = vrot.slane %v395, 4
      %v398 = vshll.u32 %v216, 16
      %v400 = vrot.slane %v398, 5
      %v401 = vor.u32 %v397, %v400
      %v402 = vrot.slane %v401, 4
      %v404 = vshll.u32 %v347, 16
      %v406 = vrot.slane %v404, 5
      %v407 = vsel %vm231, %v402, %v406
      %v409 = vshrl.u32 %v217, 16
      %v411 = vrot.slane %v409, 4
      %v412 = vshll.u32 %v217, 16
      %v414 = vrot.slane %v412, 5
      %v415 = vor.u32 %v411, %v414
      %v416 = vrot.slane %v415, 4
      %v418 = vshll.u32 %v348, 16
      %v420 = vrot.slane %v418, 5
      %v421 = vsel %vm231, %v416, %v420
      %v423 = vshrl.u32 %v218, 16
      %v425 = vrot.slane %v423, 4
      %v426 = vshll.u32 %v218, 16
      %v428 = vrot.slane %v426, 5
      %v429 = vor.u32 %v425, %v428
      %v430 = vrot.slane %v429, 4
      %v432 = vshll.u32 %v349, 16
      %v434 = vrot.slane %v432, 5
      %v435 = vsel %vm231, %v430, %v434
      %v437 = vshrl.u32 %v219, 16
      %v439 = vrot.slane %v437, 4
      %v440 = vshll.u32 %v219, 16
      %v442 = vrot.slane %v440, 5
      %v443 = vor.u32 %v439, %v442
      %v444 = vrot.slane %v443, 4
      %v446 = vshll.u32 %v350, 16
      %v448 = vrot.slane %v446, 5
      %v449 = vsel %vm231, %v444, %v448
      %v451 = vshrl.u32 %v220, 16
      %v453 = vrot.slane %v451, 4
      %v454 = vshll.u32 %v220, 16
      %v456 = vrot.slane %v454, 5
      %v457 = vor.u32 %v453, %v456
      %v458 = vrot.slane %v457, 4
      %v460 = vshll.u32 %v351, 16
      %v462 = vrot.slane %v460, 5
      %v463 = vsel %vm231, %v458, %v462
      %s464 = scalar_lea.vmem %s196, 144
      %v465 = vld [vmem:[%s464] sm:$0xf]
      %v466 = vld [vmem:[%s464 + $0x8] sm:$0xf]
      %v467 = vld [vmem:[%s464 + $0x10] sm:$0xf]
      %v468 = vld [vmem:[%s464 + $0x18] sm:$0xf]
      %v469 = vld [vmem:[%s464 + $0x20] sm:$0xf]
      %v470 = vld [vmem:[%s464 + $0x28] sm:$0xf]
      %v471 = vld [vmem:[%s464 + $0x30] sm:$0xf]
      %v472 = vld [vmem:[%s464 + $0x38] sm:$0xf]
      %s473 = scalar_lea.vmem %s196, 216
      %v474 = vld [vmem:[%s473] sm:$0xf]
      %v475 = vld [vmem:[%s473 + $0x8] sm:$0xf]
      %v476 = vld [vmem:[%s473 + $0x10] sm:$0xf]
      %v477 = vld [vmem:[%s473 + $0x18] sm:$0xf]
      %v478 = vld [vmem:[%s473 + $0x20] sm:$0xf]
      %v479 = vld [vmem:[%s473 + $0x28] sm:$0xf]
      %v480 = vld [vmem:[%s473 + $0x30] sm:$0xf]
      %v481 = vld [vmem:[%s473 + $0x38] sm:$0xf]
      %v482 = vld [vmem:[%s464 + $0x4] sm:$0x1]
      %v483 = vld [vmem:[%s464 + $0xc] sm:$0x1]
      %v484 = vld [vmem:[%s464 + $0x14] sm:$0x1]
      %v485 = vld [vmem:[%s464 + $0x1c] sm:$0x1]
      %v486 = vld [vmem:[%s464 + $0x24] sm:$0x1]
      %v487 = vld [vmem:[%s464 + $0x2c] sm:$0x1]
      %v488 = vld [vmem:[%s464 + $0x34] sm:$0x1]
      %v489 = vld [vmem:[%s464 + $0x3c] sm:$0x1]
      %v491 = vshrl.u32 %v465, 16
      %v493 = vrot.slane %v491, 4
      %v494 = vshll.u32 %v465, 16
      %v496 = vrot.slane %v494, 5
      %v497 = vor.u32 %v493, %v496
      %v498 = vrot.slane %v497, 4
      %v500 = vshll.u32 %v482, 16
      %v502 = vrot.slane %v500, 5
      %v503 = vsel %vm231, %v498, %v502
      %v505 = vshrl.u32 %v466, 16
      %v507 = vrot.slane %v505, 4
      %v508 = vshll.u32 %v466, 16
      %v510 = vrot.slane %v508, 5
      %v511 = vor.u32 %v507, %v510
      %v512 = vrot.slane %v511, 4
      %v514 = vshll.u32 %v483, 16
      %v516 = vrot.slane %v514, 5
      %v517 = vsel %vm231, %v512, %v516
      %v519 = vshrl.u32 %v467, 16
      %v521 = vrot.slane %v519, 4
      %v522 = vshll.u32 %v467, 16
      %v524 = vrot.slane %v522, 5
      %v525 = vor.u32 %v521, %v524
      %v526 = vrot.slane %v525, 4
      %v528 = vshll.u32 %v484, 16
      %v530 = vrot.slane %v528, 5
      %v531 = vsel %vm231, %v526, %v530
      %v533 = vshrl.u32 %v468, 16
      %v535 = vrot.slane %v533, 4
      %v536 = vshll.u32 %v468, 16
      %v538 = vrot.slane %v536, 5
      %v539 = vor.u32 %v535, %v538
      %v540 = vrot.slane %v539, 4
      %v542 = vshll.u32 %v485, 16
      %v544 = vrot.slane %v542, 5
      %v545 = vsel %vm231, %v540, %v544
      %v547 = vshrl.u32 %v469, 16
      %v549 = vrot.slane %v547, 4
      %v550 = vshll.u32 %v469, 16
      %v552 = vrot.slane %v550, 5
      %v553 = vor.u32 %v549, %v552
      %v554 = vrot.slane %v553, 4
      %v556 = vshll.u32 %v486, 16
      %v558 = vrot.slane %v556, 5
      %v559 = vsel %vm231, %v554, %v558
      %v561 = vshrl.u32 %v470, 16
      %v563 = vrot.slane %v561, 4
      %v564 = vshll.u32 %v470, 16
      %v566 = vrot.slane %v564, 5
      %v567 = vor.u32 %v563, %v566
      %v568 = vrot.slane %v567, 4
      %v570 = vshll.u32 %v487, 16
      %v572 = vrot.slane %v570, 5
      %v573 = vsel %vm231, %v568, %v572
      %v575 = vshrl.u32 %v471, 16
      %v577 = vrot.slane %v575, 4
      %v578 = vshll.u32 %v471, 16
      %v580 = vrot.slane %v578, 5
      %v581 = vor.u32 %v577, %v580
      %v582 = vrot.slane %v581, 4
      %v584 = vshll.u32 %v488, 16
      %v586 = vrot.slane %v584, 5
      %v587 = vsel %vm231, %v582, %v586
      %v589 = vshrl.u32 %v472, 16
      %v591 = vrot.slane %v589, 4
      %v592 = vshll.u32 %v472, 16
      %v594 = vrot.slane %v592, 5
      %v595 = vor.u32 %v591, %v594
      %v596 = vrot.slane %v595, 4
      %v598 = vshll.u32 %v489, 16
      %v600 = vrot.slane %v598, 5
      %v601 = vsel %vm231, %v596, %v600
      %v602 = vld [vmem:[%s473 + $0x4] sm:$0x1]
      %v603 = vld [vmem:[%s473 + $0xc] sm:$0x1]
      %v604 = vld [vmem:[%s473 + $0x14] sm:$0x1]
      %v605 = vld [vmem:[%s473 + $0x1c] sm:$0x1]
      %v606 = vld [vmem:[%s473 + $0x24] sm:$0x1]
      %v607 = vld [vmem:[%s473 + $0x2c] sm:$0x1]
      %v608 = vld [vmem:[%s473 + $0x34] sm:$0x1]
      %v609 = vld [vmem:[%s473 + $0x3c] sm:$0x1]
      %v611 = vshrl.u32 %v474, 16
      %v613 = vrot.slane %v611, 4
      %v614 = vshll.u32 %v474, 16
      %v616 = vrot.slane %v614, 5
      %v617 = vor.u32 %v613, %v616
      %v618 = vrot.slane %v617, 4
      %v620 = vshll.u32 %v602, 16
      %v622 = vrot.slane %v620, 5
      %v623 = vsel %vm231, %v618, %v622
      %v625 = vshrl.u32 %v475, 16
      %v627 = vrot.slane %v625, 4
      %v628 = vshll.u32 %v475, 16
      %v630 = vrot.slane %v628, 5
      %v631 = vor.u32 %v627, %v630
      %v632 = vrot.slane %v631, 4
      %v634 = vshll.u32 %v603, 16
      %v636 = vrot.slane %v634, 5
      %v637 = vsel %vm231, %v632, %v636
      %v639 = vshrl.u32 %v476, 16
      %v641 = vrot.slane %v639, 4
      %v642 = vshll.u32 %v476, 16
      %v644 = vrot.slane %v642, 5
      %v645 = vor.u32 %v641, %v644
      %v646 = vrot.slane %v645, 4
      %v648 = vshll.u32 %v604, 16
      %v650 = vrot.slane %v648, 5
      %v651 = vsel %vm231, %v646, %v650
      %v653 = vshrl.u32 %v477, 16
      %v655 = vrot.slane %v653, 4
      %v656 = vshll.u32 %v477, 16
      %v658 = vrot.slane %v656, 5
      %v659 = vor.u32 %v655, %v658
      %v660 = vrot.slane %v659, 4
      %v662 = vshll.u32 %v605, 16
      %v664 = vrot.slane %v662, 5
      %v665 = vsel %vm231, %v660, %v664
      %v667 = vshrl.u32 %v478, 16
      %v669 = vrot.slane %v667, 4
      %v670 = vshll.u32 %v478, 16
      %v672 = vrot.slane %v670, 5
      %v673 = vor.u32 %v669, %v672
      %v674 = vrot.slane %v673, 4
      %v676 = vshll.u32 %v606, 16
      %v678 = vrot.slane %v676, 5
      %v679 = vsel %vm231, %v674, %v678
      %v681 = vshrl.u32 %v479, 16
      %v683 = vrot.slane %v681, 4
      %v684 = vshll.u32 %v479, 16
      %v686 = vrot.slane %v684, 5
      %v687 = vor.u32 %v683, %v686
      %v688 = vrot.slane %v687, 4
      %v690 = vshll.u32 %v607, 16
      %v692 = vrot.slane %v690, 5
      %v693 = vsel %vm231, %v688, %v692
      %v695 = vshrl.u32 %v480, 16
      %v697 = vrot.slane %v695, 4
      %v698 = vshll.u32 %v480, 16
      %v700 = vrot.slane %v698, 5
      %v701 = vor.u32 %v697, %v700
      %v702 = vrot.slane %v701, 4
      %v704 = vshll.u32 %v608, 16
      %v706 = vrot.slane %v704, 5
      %v707 = vsel %vm231, %v702, %v706
      %v709 = vshrl.u32 %v481, 16
      %v711 = vrot.slane %v709, 4
      %v712 = vshll.u32 %v481, 16
      %v714 = vrot.slane %v712, 5
      %v715 = vor.u32 %v711, %v714
      %v716 = vrot.slane %v715, 4
      %v718 = vshll.u32 %v609, 16
      %v720 = vrot.slane %v718, 5
      %v721 = vsel %vm231, %v716, %v720
      %s722 = scalar_lea.vmem %s196, 8
      %v723 = vld [vmem:[%s722] sm:$0xf]
      %v724 = vld [vmem:[%s722 + $0x8] sm:$0xf]
      %v725 = vld [vmem:[%s722 + $0x10] sm:$0xf]
      %v726 = vld [vmem:[%s722 + $0x18] sm:$0xf]
      %v727 = vld [vmem:[%s722 + $0x20] sm:$0xf]
      %v728 = vld [vmem:[%s722 + $0x28] sm:$0xf]
      %v729 = vld [vmem:[%s722 + $0x30] sm:$0xf]
      %v730 = vld [vmem:[%s722 + $0x38] sm:$0xf]
      %s731 = scalar_lea.vmem %s196, 80
      %v732 = vld [vmem:[%s731] sm:$0xf]
      %v733 = vld [vmem:[%s731 + $0x8] sm:$0xf]
      %v734 = vld [vmem:[%s731 + $0x10] sm:$0xf]
      %v735 = vld [vmem:[%s731 + $0x18] sm:$0xf]
      %v736 = vld [vmem:[%s731 + $0x20] sm:$0xf]
      %v737 = vld [vmem:[%s731 + $0x28] sm:$0xf]
      %v738 = vld [vmem:[%s731 + $0x30] sm:$0xf]
      %v739 = vld [vmem:[%s731 + $0x38] sm:$0xf]
      %v740 = vld [vmem:[%s722 + $0x4] sm:$0x1]
      %v741 = vld [vmem:[%s722 + $0xc] sm:$0x1]
      %v742 = vld [vmem:[%s722 + $0x14] sm:$0x1]
      %v743 = vld [vmem:[%s722 + $0x1c] sm:$0x1]
      %v744 = vld [vmem:[%s722 + $0x24] sm:$0x1]
      %v745 = vld [vmem:[%s722 + $0x2c] sm:$0x1]
      %v746 = vld [vmem:[%s722 + $0x34] sm:$0x1]
      %v747 = vld [vmem:[%s722 + $0x3c] sm:$0x1]
      %v749 = vshrl.u32 %v723, 16
      %v751 = vrot.slane %v749, 4
      %v752 = vshll.u32 %v723, 16
      %v754 = vrot.slane %v752, 5
      %v755 = vor.u32 %v751, %v754
      %v756 = vrot.slane %v755, 4
      %v758 = vshll.u32 %v740, 16
      %v760 = vrot.slane %v758, 5
      %v761 = vsel %vm231, %v756, %v760
      %v763 = vshrl.u32 %v724, 16
      %v765 = vrot.slane %v763, 4
      %v766 = vshll.u32 %v724, 16
      %v768 = vrot.slane %v766, 5
      %v769 = vor.u32 %v765, %v768
      %v770 = vrot.slane %v769, 4
      %v772 = vshll.u32 %v741, 16
      %v774 = vrot.slane %v772, 5
      %v775 = vsel %vm231, %v770, %v774
      %v777 = vshrl.u32 %v725, 16
      %v779 = vrot.slane %v777, 4
      %v780 = vshll.u32 %v725, 16
      %v782 = vrot.slane %v780, 5
      %v783 = vor.u32 %v779, %v782
      %v784 = vrot.slane %v783, 4
      %v786 = vshll.u32 %v742, 16
      %v788 = vrot.slane %v786, 5
      %v789 = vsel %vm231, %v784, %v788
      %v791 = vshrl.u32 %v726, 16
      %v793 = vrot.slane %v791, 4
      %v794 = vshll.u32 %v726, 16
      %v796 = vrot.slane %v794, 5
      %v797 = vor.u32 %v793, %v796
      %v798 = vrot.slane %v797, 4
      %v800 = vshll.u32 %v743, 16
      %v802 = vrot.slane %v800, 5
      %v803 = vsel %vm231, %v798, %v802
      %v805 = vshrl.u32 %v727, 16
      %v807 = vrot.slane %v805, 4
      %v808 = vshll.u32 %v727, 16
      %v810 = vrot.slane %v808, 5
      %v811 = vor.u32 %v807, %v810
      %v812 = vrot.slane %v811, 4
      %v814 = vshll.u32 %v744, 16
      %v816 = vrot.slane %v814, 5
      %v817 = vsel %vm231, %v812, %v816
      %v819 = vshrl.u32 %v728, 16
      %v821 = vrot.slane %v819, 4
      %v822 = vshll.u32 %v728, 16
      %v824 = vrot.slane %v822, 5
      %v825 = vor.u32 %v821, %v824
      %v826 = vrot.slane %v825, 4
      %v828 = vshll.u32 %v745, 16
      %v830 = vrot.slane %v828, 5
      %v831 = vsel %vm231, %v826, %v830
      %v833 = vshrl.u32 %v729, 16
      %v835 = vrot.slane %v833, 4
      %v836 = vshll.u32 %v729, 16
      %v838 = vrot.slane %v836, 5
      %v839 = vor.u32 %v835, %v838
      %v840 = vrot.slane %v839, 4
      %v842 = vshll.u32 %v746, 16
      %v844 = vrot.slane %v842, 5
      %v845 = vsel %vm231, %v840, %v844
      %v847 = vshrl.u32 %v730, 16
      %v849 = vrot.slane %v847, 4
      %v850 = vshll.u32 %v730, 16
      %v852 = vrot.slane %v850, 5
      %v853 = vor.u32 %v849, %v852
      %v854 = vrot.slane %v853, 4
      %v856 = vshll.u32 %v747, 16
      %v858 = vrot.slane %v856, 5
      %v859 = vsel %vm231, %v854, %v858
      %v860 = vld [vmem:[%s731 + $0x4] sm:$0x1]
      %v861 = vld [vmem:[%s731 + $0xc] sm:$0x1]
      %v862 = vld [vmem:[%s731 + $0x14] sm:$0x1]
      %v863 = vld [vmem:[%s731 + $0x1c] sm:$0x1]
      %v864 = vld [vmem:[%s731 + $0x24] sm:$0x1]
      %v865 = vld [vmem:[%s731 + $0x2c] sm:$0x1]
      %v866 = vld [vmem:[%s731 + $0x34] sm:$0x1]
      %v867 = vld [vmem:[%s731 + $0x3c] sm:$0x1]
      %v869 = vshrl.u32 %v732, 16
      %v871 = vrot.slane %v869, 4
      %v872 = vshll.u32 %v732, 16
      %v874 = vrot.slane %v872, 5
      %v875 = vor.u32 %v871, %v874
      %v876 = vrot.slane %v875, 4
      %v878 = vshll.u32 %v860, 16
      %v880 = vrot.slane %v878, 5
      %v881 = vsel %vm231, %v876, %v880
      %v883 = vshrl.u32 %v733, 16
      %v885 = vrot.slane %v883, 4
      %v886 = vshll.u32 %v733, 16
      %v888 = vrot.slane %v886, 5
      %v889 = vor.u32 %v885, %v888
      %v890 = vrot.slane %v889, 4
      %v892 = vshll.u32 %v861, 16
      %v894 = vrot.slane %v892, 5
      %v895 = vsel %vm231, %v890, %v894
      %v897 = vshrl.u32 %v734, 16
      %v899 = vrot.slane %v897, 4
      %v900 = vshll.u32 %v734, 16
      %v902 = vrot.slane %v900, 5
      %v903 = vor.u32 %v899, %v902
      %v904 = vrot.slane %v903, 4
      %v906 = vshll.u32 %v862, 16
      %v908 = vrot.slane %v906, 5
      %v909 = vsel %vm231, %v904, %v908
      %v911 = vshrl.u32 %v735, 16
      %v913 = vrot.slane %v911, 4
      %v914 = vshll.u32 %v735, 16
      %v916 = vrot.slane %v914, 5
      %v917 = vor.u32 %v913, %v916
      %v918 = vrot.slane %v917, 4
      %v920 = vshll.u32 %v863, 16
      %v922 = vrot.slane %v920, 5
      %v923 = vsel %vm231, %v918, %v922
      %v925 = vshrl.u32 %v736, 16
      %v927 = vrot.slane %v925, 4
      %v928 = vshll.u32 %v736, 16
      %v930 = vrot.slane %v928, 5
      %v931 = vor.u32 %v927, %v930
      %v932 = vrot.slane %v931, 4
      %v934 = vshll.u32 %v864, 16
      %v936 = vrot.slane %v934, 5
      %v937 = vsel %vm231, %v932, %v936
      %v939 = vshrl.u32 %v737, 16
      %v941 = vrot.slane %v939, 4
      %v942 = vshll.u32 %v737, 16
      %v944 = vrot.slane %v942, 5
      %v945 = vor.u32 %v941, %v944
      %v946 = vrot.slane %v945, 4
      %v948 = vshll.u32 %v865, 16
      %v950 = vrot.slane %v948, 5
      %v951 = vsel %vm231, %v946, %v950
      %v953 = vshrl.u32 %v738, 16
      %v955 = vrot.slane %v953, 4
      %v956 = vshll.u32 %v738, 16
      %v958 = vrot.slane %v956, 5
      %v959 = vor.u32 %v955, %v958
      %v960 = vrot.slane %v959, 4
      %v962 = vshll.u32 %v866, 16
      %v964 = vrot.slane %v962, 5
      %v965 = vsel %vm231, %v960, %v964
      %v967 = vshrl.u32 %v739, 16
      %v969 = vrot.slane %v967, 4
      %v970 = vshll.u32 %v739, 16
      %v972 = vrot.slane %v970, 5
      %v973 = vor.u32 %v969, %v972
      %v974 = vrot.slane %v973, 4
      %v976 = vshll.u32 %v867, 16
      %v978 = vrot.slane %v976, 5
      %v979 = vsel %vm231, %v974, %v978
      %s980 = scalar_lea.vmem %s196, 152
      %v981 = vld [vmem:[%s980] sm:$0xf]
      %v982 = vld [vmem:[%s980 + $0x8] sm:$0xf]
      %v983 = vld [vmem:[%s980 + $0x10] sm:$0xf]
      %v984 = vld [vmem:[%s980 + $0x18] sm:$0xf]
      %v985 = vld [vmem:[%s980 + $0x20] sm:$0xf]
      %v986 = vld [vmem:[%s980 + $0x28] sm:$0xf]
      %v987 = vld [vmem:[%s980 + $0x30] sm:$0xf]
      %v988 = vld [vmem:[%s980 + $0x38] sm:$0xf]
      %s989 = scalar_lea.vmem %s196, 224
      %v990 = vld [vmem:[%s989] sm:$0xf]
      %v991 = vld [vmem:[%s989 + $0x8] sm:$0xf]
      %v992 = vld [vmem:[%s989 + $0x10] sm:$0xf]
      %v993 = vld [vmem:[%s989 + $0x18] sm:$0xf]
      %v994 = vld [vmem:[%s989 + $0x20] sm:$0xf]
      %v995 = vld [vmem:[%s989 + $0x28] sm:$0xf]
      %v996 = vld [vmem:[%s989 + $0x30] sm:$0xf]
      %v997 = vld [vmem:[%s989 + $0x38] sm:$0xf]
      %v998 = vld [vmem:[%s980 + $0x4] sm:$0x1]
      %v999 = vld [vmem:[%s980 + $0xc] sm:$0x1]
      %v1000 = vld [vmem:[%s980 + $0x14] sm:$0x1]
      %v1001 = vld [vmem:[%s980 + $0x1c] sm:$0x1]
      %v1002 = vld [vmem:[%s980 + $0x24] sm:$0x1]
      %v1003 = vld [vmem:[%s980 + $0x2c] sm:$0x1]
      %v1004 = vld [vmem:[%s980 + $0x34] sm:$0x1]
      %v1005 = vld [vmem:[%s980 + $0x3c] sm:$0x1]
      %v1007 = vshrl.u32 %v981, 16
      %v1009 = vrot.slane %v1007, 4
      %v1010 = vshll.u32 %v981, 16
      %v1012 = vrot.slane %v1010, 5
      %v1013 = vor.u32 %v1009, %v1012
      %v1014 = vrot.slane %v1013, 4
      %v1016 = vshll.u32 %v998, 16
      %v1018 = vrot.slane %v1016, 5
      %v1019 = vsel %vm231, %v1014, %v1018
      %v1021 = vshrl.u32 %v982, 16
      %v1023 = vrot.slane %v1021, 4
      %v1024 = vshll.u32 %v982, 16
      %v1026 = vrot.slane %v1024, 5
      %v1027 = vor.u32 %v1023, %v1026
      %v1028 = vrot.slane %v1027, 4
      %v1030 = vshll.u32 %v999, 16
      %v1032 = vrot.slane %v1030, 5
      %v1033 = vsel %vm231, %v1028, %v1032
      %v1035 = vshrl.u32 %v983, 16
      %v1037 = vrot.slane %v1035, 4
      %v1038 = vshll.u32 %v983, 16
      %v1040 = vrot.slane %v1038, 5
      %v1041 = vor.u32 %v1037, %v1040
      %v1042 = vrot.slane %v1041, 4
      %v1044 = vshll.u32 %v1000, 16
      %v1046 = vrot.slane %v1044, 5
      %v1047 = vsel %vm231, %v1042, %v1046
      %v1049 = vshrl.u32 %v984, 16
      %v1051 = vrot.slane %v1049, 4
      %v1052 = vshll.u32 %v984, 16
      %v1054 = vrot.slane %v1052, 5
      %v1055 = vor.u32 %v1051, %v1054
      %v1056 = vrot.slane %v1055, 4
      %v1058 = vshll.u32 %v1001, 16
      %v1060 = vrot.slane %v1058, 5
      %v1061 = vsel %vm231, %v1056, %v1060
      %v1063 = vshrl.u32 %v985, 16
      %v1065 = vrot.slane %v1063, 4
      %v1066 = vshll.u32 %v985, 16
      %v1068 = vrot.slane %v1066, 5
      %v1069 = vor.u32 %v1065, %v1068
      %v1070 = vrot.slane %v1069, 4
      %v1072 = vshll.u32 %v1002, 16
      %v1074 = vrot.slane %v1072, 5
      %v1075 = vsel %vm231, %v1070, %v1074
      %v1077 = vshrl.u32 %v986, 16
      %v1079 = vrot.slane %v1077, 4
      %v1080 = vshll.u32 %v986, 16
      %v1082 = vrot.slane %v1080, 5
      %v1083 = vor.u32 %v1079, %v1082
      %v1084 = vrot.slane %v1083, 4
      %v1086 = vshll.u32 %v1003, 16
      %v1088 = vrot.slane %v1086, 5
      %v1089 = vsel %vm231, %v1084, %v1088
      %v1091 = vshrl.u32 %v987, 16
      %v1093 = vrot.slane %v1091, 4
      %v1094 = vshll.u32 %v987, 16
      %v1096 = vrot.slane %v1094, 5
      %v1097 = vor.u32 %v1093, %v1096
      %v1098 = vrot.slane %v1097, 4
      %v1100 = vshll.u32 %v1004, 16
      %v1102 = vrot.slane %v1100, 5
      %v1103 = vsel %vm231, %v1098, %v1102
      %v1105 = vshrl.u32 %v988, 16
      %v1107 = vrot.slane %v1105, 4
      %v1108 = vshll.u32 %v988, 16
      %v1110 = vrot.slane %v1108, 5
      %v1111 = vor.u32 %v1107, %v1110
      %v1112 = vrot.slane %v1111, 4
      %v1114 = vshll.u32 %v1005, 16
      %v1116 = vrot.slane %v1114, 5
      %v1117 = vsel %vm231, %v1112, %v1116
      %v1118 = vld [vmem:[%s989 + $0x4] sm:$0x1]
      %v1119 = vld [vmem:[%s989 + $0xc] sm:$0x1]
      %v1120 = vld [vmem:[%s989 + $0x14] sm:$0x1]
      %v1121 = vld [vmem:[%s989 + $0x1c] sm:$0x1]
      %v1122 = vld [vmem:[%s989 + $0x24] sm:$0x1]
      %v1123 = vld [vmem:[%s989 + $0x2c] sm:$0x1]
      %v1124 = vld [vmem:[%s989 + $0x34] sm:$0x1]
      %v1125 = vld [vmem:[%s989 + $0x3c] sm:$0x1]
      %v1127 = vshrl.u32 %v990, 16
      %v1129 = vrot.slane %v1127, 4
      %v1130 = vshll.u32 %v990, 16
      %v1132 = vrot.slane %v1130, 5
      %v1133 = vor.u32 %v1129, %v1132
      %v1134 = vrot.slane %v1133, 4
      %v1136 = vshll.u32 %v1118, 16
      %v1138 = vrot.slane %v1136, 5
      %v1139 = vsel %vm231, %v1134, %v1138
      %v1141 = vshrl.u32 %v991, 16
      %v1143 = vrot.slane %v1141, 4
      %v1144 = vshll.u32 %v991, 16
      %v1146 = vrot.slane %v1144, 5
      %v1147 = vor.u32 %v1143, %v1146
      %v1148 = vrot.slane %v1147, 4
      %v1150 = vshll.u32 %v1119, 16
      %v1152 = vrot.slane %v1150, 5
      %v1153 = vsel %vm231, %v1148, %v1152
      %v1155 = vshrl.u32 %v992, 16
      %v1157 = vrot.slane %v1155, 4
      %v1158 = vshll.u32 %v992, 16
      %v1160 = vrot.slane %v1158, 5
      %v1161 = vor.u32 %v1157, %v1160
      %v1162 = vrot.slane %v1161, 4
      %v1164 = vshll.u32 %v1120, 16
      %v1166 = vrot.slane %v1164, 5
      %v1167 = vsel %vm231, %v1162, %v1166
      %v1169 = vshrl.u32 %v993, 16
      %v1171 = vrot.slane %v1169, 4
      %v1172 = vshll.u32 %v993, 16
      %v1174 = vrot.slane %v1172, 5
      %v1175 = vor.u32 %v1171, %v1174
      %v1176 = vrot.slane %v1175, 4
      %v1178 = vshll.u32 %v1121, 16
      %v1180 = vrot.slane %v1178, 5
      %v1181 = vsel %vm231, %v1176, %v1180
      %v1183 = vshrl.u32 %v994, 16
      %v1185 = vrot.slane %v1183, 4
      %v1186 = vshll.u32 %v994, 16
      %v1188 = vrot.slane %v1186, 5
      %v1189 = vor.u32 %v1185, %v1188
      %v1190 = vrot.slane %v1189, 4
      %v1192 = vshll.u32 %v1122, 16
      %v1194 = vrot.slane %v1192, 5
      %v1195 = vsel %vm231, %v1190, %v1194
      %v1197 = vshrl.u32 %v995, 16
      %v1199 = vrot.slane %v1197, 4
      %v1200 = vshll.u32 %v995, 16
      %v1202 = vrot.slane %v1200, 5
      %v1203 = vor.u32 %v1199, %v1202
      %v1204 = vrot.slane %v1203, 4
      %v1206 = vshll.u32 %v1123, 16
      %v1208 = vrot.slane %v1206, 5
      %v1209 = vsel %vm231, %v1204, %v1208
      %v1211 = vshrl.u32 %v996, 16
      %v1213 = vrot.slane %v1211, 4
      %v1214 = vshll.u32 %v996, 16
      %v1216 = vrot.slane %v1214, 5
      %v1217 = vor.u32 %v1213, %v1216
      %v1218 = vrot.slane %v1217, 4
      %v1220 = vshll.u32 %v1124, 16
      %v1222 = vrot.slane %v1220, 5
      %v1223 = vsel %vm231, %v1218, %v1222
      %v1225 = vshrl.u32 %v997, 16
      %v1227 = vrot.slane %v1225, 4
      %v1228 = vshll.u32 %v997, 16
      %v1230 = vrot.slane %v1228, 5
      %v1231 = vor.u32 %v1227, %v1230
      %v1232 = vrot.slane %v1231, 4
      %v1234 = vshll.u32 %v1125, 16
      %v1236 = vrot.slane %v1234, 5
      %v1237 = vsel %vm231, %v1232, %v1236
      %v1246 = vunpack.c.l.b16 %v204
      %v1247 = vunpack.c.l.b16 %v205
      %v1248 = vunpack.c.l.b16 %v206
      %v1249 = vunpack.c.l.b16 %v207
      %v1250 = vunpack.c.l.b16 %v208
      %v1251 = vunpack.c.l.b16 %v209
      %v1252 = vunpack.c.l.b16 %v210
      %v1253 = vunpack.c.l.b16 %v211
      %v1254 = vpack.c.b16 %v1247, %v1246
      %v1255 = vpack.c.b16 %v1249, %v1248
      %v1256 = vpack.c.b16 %v1251, %v1250
      %v1257 = vpack.c.b16 %v1253, %v1252
      %v1266 = vunpack.c.l.b16 %v213
      %v1267 = vunpack.c.l.b16 %v214
      %v1268 = vunpack.c.l.b16 %v215
      %v1269 = vunpack.c.l.b16 %v216
      %v1270 = vunpack.c.l.b16 %v217
      %v1271 = vunpack.c.l.b16 %v218
      %v1272 = vunpack.c.l.b16 %v219
      %v1273 = vunpack.c.l.b16 %v220
      %v1274 = vpack.c.b16 %v1267, %v1266
      %v1275 = vpack.c.b16 %v1269, %v1268
      %v1276 = vpack.c.b16 %v1271, %v1270
      %v1277 = vpack.c.b16 %v1273, %v1272
      %1278 = vrot.lane.b32.xlu0 %v1274, 3
      %v1279 = vpop.permute.xlu0 %1278
      %1280 = vrot.lane.b32.xlu0 %v1275, 3
      %v1281 = vpop.permute.xlu0 %1280
      %1282 = vrot.lane.b32.xlu0 %v1276, 3
      %v1283 = vpop.permute.xlu0 %1282
      %1284 = vrot.lane.b32.xlu0 %v1277, 3
      %v1285 = vpop.permute.xlu0 %1284
      %v1286 = vunpack.c.l.b16 %v245
      %v1287 = vunpack.c.l.b16 %v259
      %v1288 = vunpack.c.l.b16 %v273
      %v1289 = vunpack.c.l.b16 %v287
      %v1290 = vunpack.c.l.b16 %v301
      %v1291 = vunpack.c.l.b16 %v315
      %v1292 = vunpack.c.l.b16 %v329
      %v1293 = vunpack.c.l.b16 %v343
      %v1294 = vpack.c.b16 %v1287, %v1286
      %v1295 = vpack.c.b16 %v1289, %v1288
      %v1296 = vpack.c.b16 %v1291, %v1290
      %v1297 = vpack.c.b16 %v1293, %v1292
      %1298 = vrot.lane.b32.xlu0 %v1294, 6
      %v1299 = vpop.permute.xlu0 %1298
      %1300 = vrot.lane.b32.xlu0 %v1295, 6
      %v1301 = vpop.permute.xlu0 %1300
      %1302 = vrot.lane.b32.xlu0 %v1296, 6
      %v1303 = vpop.permute.xlu0 %1302
      %1304 = vrot.lane.b32.xlu0 %v1297, 6
      %v1305 = vpop.permute.xlu0 %1304
      %v1306 = vunpack.c.l.b16 %v365
      %v1307 = vunpack.c.l.b16 %v379
      %v1308 = vunpack.c.l.b16 %v393
      %v1309 = vunpack.c.l.b16 %v407
      %v1310 = vunpack.c.l.b16 %v421
      %v1311 = vunpack.c.l.b16 %v435
      %v1312 = vunpack.c.l.b16 %v449
      %v1313 = vunpack.c.l.b16 %v463
      %v1314 = vpack.c.b16 %v1307, %v1306
      %v1315 = vpack.c.b16 %v1309, %v1308
      %v1316 = vpack.c.b16 %v1311, %v1310
      %v1317 = vpack.c.b16 %v1313, %v1312
      %1318 = vrot.lane.b32.xlu0 %v1314, 9
      %v1319 = vpop.permute.xlu0 %1318
      %1320 = vrot.lane.b32.xlu0 %v1315, 9
      %v1321 = vpop.permute.xlu0 %1320
      %1322 = vrot.lane.b32.xlu0 %v1316, 9
      %v1323 = vpop.permute.xlu0 %1322
      %1324 = vrot.lane.b32.xlu0 %v1317, 9
      %v1325 = vpop.permute.xlu0 %1324
      %v1334 = vunpack.c.l.b16 %v465
      %v1335 = vunpack.c.l.b16 %v466
      %v1336 = vunpack.c.l.b16 %v467
      %v1337 = vunpack.c.l.b16 %v468
      %v1338 = vunpack.c.l.b16 %v469
      %v1339 = vunpack.c.l.b16 %v470
      %v1340 = vunpack.c.l.b16 %v471
      %v1341 = vunpack.c.l.b16 %v472
      %v1342 = vpack.c.b16 %v1335, %v1334
      %v1343 = vpack.c.b16 %v1337, %v1336
      %v1344 = vpack.c.b16 %v1339, %v1338
      %v1345 = vpack.c.b16 %v1341, %v1340
      %1346 = vrot.lane.b32.xlu0 %v1342, 12
      %v1347 = vpop.permute.xlu0 %1346
      %1348 = vrot.lane.b32.xlu0 %v1343, 12
      %v1349 = vpop.permute.xlu0 %1348
      %1350 = vrot.lane.b32.xlu0 %v1344, 12
      %v1351 = vpop.permute.xlu0 %1350
      %1352 = vrot.lane.b32.xlu0 %v1345, 12
      %v1353 = vpop.permute.xlu0 %1352
      %v1362 = vunpack.c.l.b16 %v474
      %v1363 = vunpack.c.l.b16 %v475
      %v1364 = vunpack.c.l.b16 %v476
      %v1365 = vunpack.c.l.b16 %v477
      %v1366 = vunpack.c.l.b16 %v478
      %v1367 = vunpack.c.l.b16 %v479
      %v1368 = vunpack.c.l.b16 %v480
      %v1369 = vunpack.c.l.b16 %v481
      %v1370 = vpack.c.b16 %v1363, %v1362
      %v1371 = vpack.c.b16 %v1365, %v1364
      %v1372 = vpack.c.b16 %v1367, %v1366
      %v1373 = vpack.c.b16 %v1369, %v1368
      %1374 = vrot.lane.b32.xlu0 %v1370, 15
      %v1375 = vpop.permute.xlu0 %1374
      %1376 = vrot.lane.b32.xlu0 %v1371, 15
      %v1377 = vpop.permute.xlu0 %1376
      %1378 = vrot.lane.b32.xlu0 %v1372, 15
      %v1379 = vpop.permute.xlu0 %1378
      %1380 = vrot.lane.b32.xlu0 %v1373, 15
      %v1381 = vpop.permute.xlu0 %1380
      %v1382 = vunpack.c.l.b16 %v503
      %v1383 = vunpack.c.l.b16 %v517
      %v1384 = vunpack.c.l.b16 %v531
      %v1385 = vunpack.c.l.b16 %v545
      %v1386 = vunpack.c.l.b16 %v559
      %v1387 = vunpack.c.l.b16 %v573
      %v1388 = vunpack.c.l.b16 %v587
      %v1389 = vunpack.c.l.b16 %v601
      %v1390 = vpack.c.b16 %v1383, %v1382
      %v1391 = vpack.c.b16 %v1385, %v1384
      %v1392 = vpack.c.b16 %v1387, %v1386
      %v1393 = vpack.c.b16 %v1389, %v1388
      %1394 = vrot.lane.b32.xlu0 %v1390, 18
      %v1395 = vpop.permute.xlu0 %1394
      %1396 = vrot.lane.b32.xlu0 %v1391, 18
      %v1397 = vpop.permute.xlu0 %1396
      %1398 = vrot.lane.b32.xlu0 %v1392, 18
      %v1399 = vpop.permute.xlu0 %1398
      %1400 = vrot.lane.b32.xlu0 %v1393, 18
      %v1401 = vpop.permute.xlu0 %1400
      %v1402 = vunpack.c.l.b16 %v623
      %v1403 = vunpack.c.l.b16 %v637
      %v1404 = vunpack.c.l.b16 %v651
      %v1405 = vunpack.c.l.b16 %v665
      %v1406 = vunpack.c.l.b16 %v679
      %v1407 = vunpack.c.l.b16 %v693
      %v1408 = vunpack.c.l.b16 %v707
      %v1409 = vunpack.c.l.b16 %v721
      %v1410 = vpack.c.b16 %v1403, %v1402
      %v1411 = vpack.c.b16 %v1405, %v1404
      %v1412 = vpack.c.b16 %v1407, %v1406
      %v1413 = vpack.c.b16 %v1409, %v1408
      %1414 = vrot.lane.b32.xlu0 %v1410, 21
      %v1415 = vpop.permute.xlu0 %1414
      %1416 = vrot.lane.b32.xlu0 %v1411, 21
      %v1417 = vpop.permute.xlu0 %1416
      %1418 = vrot.lane.b32.xlu0 %v1412, 21
      %v1419 = vpop.permute.xlu0 %1418
      %1420 = vrot.lane.b32.xlu0 %v1413, 21
      %v1421 = vpop.permute.xlu0 %1420
      %v1430 = vunpack.c.l.b16 %v723
      %v1431 = vunpack.c.l.b16 %v724
      %v1432 = vunpack.c.l.b16 %v725
      %v1433 = vunpack.c.l.b16 %v726
      %v1434 = vunpack.c.l.b16 %v727
      %v1435 = vunpack.c.l.b16 %v728
      %v1436 = vunpack.c.l.b16 %v729
      %v1437 = vunpack.c.l.b16 %v730
      %v1438 = vpack.c.b16 %v1431, %v1430
      %v1439 = vpack.c.b16 %v1433, %v1432
      %v1440 = vpack.c.b16 %v1435, %v1434
      %v1441 = vpack.c.b16 %v1437, %v1436
      %1442 = vrot.lane.b32.xlu0 %v1438, 24
      %v1443 = vpop.permute.xlu0 %1442
      %1444 = vrot.lane.b32.xlu0 %v1439, 24
      %v1445 = vpop.permute.xlu0 %1444
      %1446 = vrot.lane.b32.xlu0 %v1440, 24
      %v1447 = vpop.permute.xlu0 %1446
      %1448 = vrot.lane.b32.xlu0 %v1441, 24
      %v1449 = vpop.permute.xlu0 %1448
      %v1458 = vunpack.c.l.b16 %v732
      %v1459 = vunpack.c.l.b16 %v733
      %v1460 = vunpack.c.l.b16 %v734
      %v1461 = vunpack.c.l.b16 %v735
      %v1462 = vunpack.c.l.b16 %v736
      %v1463 = vunpack.c.l.b16 %v737
      %v1464 = vunpack.c.l.b16 %v738
      %v1465 = vunpack.c.l.b16 %v739
      %v1466 = vpack.c.b16 %v1459, %v1458
      %v1467 = vpack.c.b16 %v1461, %v1460
      %v1468 = vpack.c.b16 %v1463, %v1462
      %v1469 = vpack.c.b16 %v1465, %v1464
      %1470 = vrot.lane.b32.xlu0 %v1466, 27
      %v1471 = vpop.permute.xlu0 %1470
      %1472 = vrot.lane.b32.xlu0 %v1467, 27
      %v1473 = vpop.permute.xlu0 %1472
      %1474 = vrot.lane.b32.xlu0 %v1468, 27
      %v1475 = vpop.permute.xlu0 %1474
      %1476 = vrot.lane.b32.xlu0 %v1469, 27
      %v1477 = vpop.permute.xlu0 %1476
      %v1478 = vunpack.c.l.b16 %v761
      %v1479 = vunpack.c.l.b16 %v775
      %v1480 = vunpack.c.l.b16 %v789
      %v1481 = vunpack.c.l.b16 %v803
      %v1482 = vunpack.c.l.b16 %v817
      %v1483 = vunpack.c.l.b16 %v831
      %v1484 = vunpack.c.l.b16 %v845
      %v1485 = vunpack.c.l.b16 %v859
      %v1486 = vpack.c.b16 %v1479, %v1478
      %v1487 = vpack.c.b16 %v1481, %v1480
      %v1488 = vpack.c.b16 %v1483, %v1482
      %v1489 = vpack.c.b16 %v1485, %v1484
      %1490 = vrot.lane.b32.xlu0 %v1486, 30
      %v1491 = vpop.permute.xlu0 %1490
      %1492 = vrot.lane.b32.xlu0 %v1487, 30
      %v1493 = vpop.permute.xlu0 %1492
      %1494 = vrot.lane.b32.xlu0 %v1488, 30
      %v1495 = vpop.permute.xlu0 %1494
      %1496 = vrot.lane.b32.xlu0 %v1489, 30
      %v1497 = vpop.permute.xlu0 %1496
      %v1498 = vunpack.c.l.b16 %v881
      %v1499 = vunpack.c.l.b16 %v895
      %v1500 = vunpack.c.l.b16 %v909
      %v1501 = vunpack.c.l.b16 %v923
      %v1502 = vunpack.c.l.b16 %v937
      %v1503 = vunpack.c.l.b16 %v951
      %v1504 = vunpack.c.l.b16 %v965
      %v1505 = vunpack.c.l.b16 %v979
      %v1506 = vpack.c.b16 %v1499, %v1498
      %v1507 = vpack.c.b16 %v1501, %v1500
      %v1508 = vpack.c.b16 %v1503, %v1502
      %v1509 = vpack.c.b16 %v1505, %v1504
      %1510 = vrot.lane.b32.xlu0 %v1506, 33
      %v1511 = vpop.permute.xlu0 %1510
      %1512 = vrot.lane.b32.xlu0 %v1507, 33
      %v1513 = vpop.permute.xlu0 %1512
      %1514 = vrot.lane.b32.xlu0 %v1508, 33
      %v1515 = vpop.permute.xlu0 %1514
      %1516 = vrot.lane.b32.xlu0 %v1509, 33
      %v1517 = vpop.permute.xlu0 %1516
      %v1526 = vunpack.c.l.b16 %v981
      %v1527 = vunpack.c.l.b16 %v982
      %v1528 = vunpack.c.l.b16 %v983
      %v1529 = vunpack.c.l.b16 %v984
      %v1530 = vunpack.c.l.b16 %v985
      %v1531 = vunpack.c.l.b16 %v986
      %v1532 = vunpack.c.l.b16 %v987
      %v1533 = vunpack.c.l.b16 %v988
      %v1534 = vpack.c.b16 %v1527, %v1526
      %v1535 = vpack.c.b16 %v1529, %v1528
      %v1536 = vpack.c.b16 %v1531, %v1530
      %v1537 = vpack.c.b16 %v1533, %v1532
      %1538 = vrot.lane.b32.xlu0 %v1534, 36
      %v1539 = vpop.permute.xlu0 %1538
      %1540 = vrot.lane.b32.xlu0 %v1535, 36
      %v1541 = vpop.permute.xlu0 %1540
      %1542 = vrot.lane.b32.xlu0 %v1536, 36
      %v1543 = vpop.permute.xlu0 %1542
      %1544 = vrot.lane.b32.xlu0 %v1537, 36
      %v1545 = vpop.permute.xlu0 %1544
      %v1554 = vunpack.c.l.b16 %v990
      %v1555 = vunpack.c.l.b16 %v991
      %v1556 = vunpack.c.l.b16 %v992
      %v1557 = vunpack.c.l.b16 %v993
      %v1558 = vunpack.c.l.b16 %v994
      %v1559 = vunpack.c.l.b16 %v995
      %v1560 = vunpack.c.l.b16 %v996
      %v1561 = vunpack.c.l.b16 %v997
      %v1562 = vpack.c.b16 %v1555, %v1554
      %v1563 = vpack.c.b16 %v1557, %v1556
      %v1564 = vpack.c.b16 %v1559, %v1558
      %v1565 = vpack.c.b16 %v1561, %v1560
      %1566 = vrot.lane.b32.xlu0 %v1562, 39
      %v1567 = vpop.permute.xlu0 %1566
      %1568 = vrot.lane.b32.xlu0 %v1563, 39
      %v1569 = vpop.permute.xlu0 %1568
      %1570 = vrot.lane.b32.xlu0 %v1564, 39
      %v1571 = vpop.permute.xlu0 %1570
      %1572 = vrot.lane.b32.xlu0 %v1565, 39
      %v1573 = vpop.permute.xlu0 %1572
      %v1574 = vunpack.c.l.b16 %v1019
      %v1575 = vunpack.c.l.b16 %v1033
      %v1576 = vunpack.c.l.b16 %v1047
      %v1577 = vunpack.c.l.b16 %v1061
      %v1578 = vunpack.c.l.b16 %v1075
      %v1579 = vunpack.c.l.b16 %v1089
      %v1580 = vunpack.c.l.b16 %v1103
      %v1581 = vunpack.c.l.b16 %v1117
      %v1582 = vpack.c.b16 %v1575, %v1574
      %v1583 = vpack.c.b16 %v1577, %v1576
      %v1584 = vpack.c.b16 %v1579, %v1578
      %v1585 = vpack.c.b16 %v1581, %v1580
      %1586 = vrot.lane.b32.xlu0 %v1582, 42
      %v1587 = vpop.permute.xlu0 %1586
      %1588 = vrot.lane.b32.xlu0 %v1583, 42
      %v1589 = vpop.permute.xlu0 %1588
      %1590 = vrot.lane.b32.xlu0 %v1584, 42
      %v1591 = vpop.permute.xlu0 %1590
      %1592 = vrot.lane.b32.xlu0 %v1585, 42
      %v1593 = vpop.permute.xlu0 %1592
      %v1594 = vunpack.c.l.b16 %v1139
      %v1595 = vunpack.c.l.b16 %v1153
      %v1596 = vunpack.c.l.b16 %v1167
      %v1597 = vunpack.c.l.b16 %v1181
      %v1598 = vunpack.c.l.b16 %v1195
      %v1599 = vunpack.c.l.b16 %v1209
      %v1600 = vunpack.c.l.b16 %v1223
      %v1601 = vunpack.c.l.b16 %v1237
      %v1602 = vpack.c.b16 %v1595, %v1594
      %v1603 = vpack.c.b16 %v1597, %v1596
      %v1604 = vpack.c.b16 %v1599, %v1598
      %v1605 = vpack.c.b16 %v1601, %v1600
      %1606 = vrot.lane.b32.xlu0 %v1602, 45
      %v1607 = vpop.permute.xlu0 %1606
      %1608 = vrot.lane.b32.xlu0 %v1603, 45
      %v1609 = vpop.permute.xlu0 %1608
      %1610 = vrot.lane.b32.xlu0 %v1604, 45
      %v1611 = vpop.permute.xlu0 %1610
      %1612 = vrot.lane.b32.xlu0 %v1605, 45
      %v1613 = vpop.permute.xlu0 %1612
      %vm1614 = vcmask 23552
      %v1617 = vsel %vm1614, %v1254, %v1279
      %v1620 = vsel %vm1614, %v1255, %v1281
      %v1623 = vsel %vm1614, %v1256, %v1283
      %v1626 = vsel %vm1614, %v1257, %v1285
      %vm1627 = vcmask 48128
      %v1629 = vsel %vm1627, %v1617, %v1299
      %v1631 = vsel %vm1627, %v1620, %v1301
      %v1633 = vsel %vm1627, %v1623, %v1303
      %v1635 = vsel %vm1627, %v1626, %v1305
      %vm1636 = vcmask 72704
      %v1638 = vsel %vm1636, %v1629, %v1319
      %v1640 = vsel %vm1636, %v1631, %v1321
      %v1642 = vsel %vm1636, %v1633, %v1323
      %v1644 = vsel %vm1636, %v1635, %v1325
      %vm1645 = vcmask 97280
      %v1647 = vsel %vm1645, %v1638, %v1347
      %v1649 = vsel %vm1645, %v1640, %v1349
      %v1651 = vsel %vm1645, %v1642, %v1351
      %v1653 = vsel %vm1645, %v1644, %v1353
      %vm1654 = vcmask 121856
      %v1656 = vsel %vm1654, %v1647, %v1375
      %v1658 = vsel %vm1654, %v1649, %v1377
      %v1660 = vsel %vm1654, %v1651, %v1379
      %v1662 = vsel %vm1654, %v1653, %v1381
      %vm1663 = vcmask 146432
      %v1665 = vsel %vm1663, %v1656, %v1395
      %v1667 = vsel %vm1663, %v1658, %v1397
      %v1669 = vsel %vm1663, %v1660, %v1399
      %v1671 = vsel %vm1663, %v1662, %v1401
      %vm1672 = vcmask 171008
      %v1674 = vsel %vm1672, %v1665, %v1415
      %v1676 = vsel %vm1672, %v1667, %v1417
      %v1678 = vsel %vm1672, %v1669, %v1419
      %v1680 = vsel %vm1672, %v1671, %v1421
      %vm1681 = vcmask 195584
      %v1683 = vsel %vm1681, %v1674, %v1443
      %v1685 = vsel %vm1681, %v1676, %v1445
      %v1687 = vsel %vm1681, %v1678, %v1447
      %v1689 = vsel %vm1681, %v1680, %v1449
      %vm1690 = vcmask 220160
      %v1692 = vsel %vm1690, %v1683, %v1471
      %v1694 = vsel %vm1690, %v1685, %v1473
      %v1696 = vsel %vm1690, %v1687, %v1475
      %v1698 = vsel %vm1690, %v1689, %v1477
      %vm1699 = vcmask 244736
      %v1701 = vsel %vm1699, %v1692, %v1491
      %v1703 = vsel %vm1699, %v1694, %v1493
      %v1705 = vsel %vm1699, %v1696, %v1495
      %v1707 = vsel %vm1699, %v1698, %v1497
      %vm1708 = vcmask 269312
      %v1710 = vsel %vm1708, %v1701, %v1511
      %v1712 = vsel %vm1708, %v1703, %v1513
      %v1714 = vsel %vm1708, %v1705, %v1515
      %v1716 = vsel %vm1708, %v1707, %v1517
      %vm1717 = vcmask 293888
      %v1719 = vsel %vm1717, %v1710, %v1539
      %v1721 = vsel %vm1717, %v1712, %v1541
      %v1723 = vsel %vm1717, %v1714, %v1543
      %v1725 = vsel %vm1717, %v1716, %v1545
      %vm1726 = vcmask 318464
      %v1728 = vsel %vm1726, %v1719, %v1567
      %v1730 = vsel %vm1726, %v1721, %v1569
      %v1732 = vsel %vm1726, %v1723, %v1571
      %v1734 = vsel %vm1726, %v1725, %v1573
      %vm1735 = vcmask 343040
      %v1737 = vsel %vm1735, %v1728, %v1587
      %v1739 = vsel %vm1735, %v1730, %v1589
      %v1741 = vsel %vm1735, %v1732, %v1591
      %v1743 = vsel %vm1735, %v1734, %v1593
      %vm1744 = vcmask 367616
      %v1746 = vsel %vm1744, %v1737, %v1607
      %v1748 = vsel %vm1744, %v1739, %v1609
      %v1750 = vsel %vm1744, %v1741, %v1611
      %v1752 = vsel %vm1744, %v1743, %v1613
      %v1753 = vld [vmem:[%s1] sm:$0xf]
      %v1754 = vld [vmem:[%s1 + $0x4] sm:$0xf]
      %v1755 = vld [vmem:[%s1 + $0x8] sm:$0xf]
      %v1756 = vld [vmem:[%s1 + $0xc] sm:$0xf]
      %v1757 = vld [vmem:[%s1 + $0x10] sm:$0xf]
      %v1758 = vld [vmem:[%s1 + $0x14] sm:$0xf]
      %v1765 = vunpack.c.l.b16 %v1753
      %v1766 = vunpack.c.l.b16 %v1754
      %v1767 = vunpack.c.l.b16 %v1755
      %v1768 = vunpack.c.l.b16 %v1756
      %v1769 = vunpack.c.l.b16 %v1757
      %v1770 = vunpack.c.l.b16 %v1758
      %v1771 = vpack.c.b16 %v1766, %v1765
      %v1772 = vpack.c.b16 %v1768, %v1767
      %v1773 = vpack.c.b16 %v1770, %v1769
      %vm1777 = vcmask 392192
      %v1778 = vsel %vm1777, %v1746, 0
      %v1780 = vsel %vm1777, %v1748, 0
      %v1782 = vsel %vm1777, %v1750, 0
      %v1784 = vsel %vm1777, %v1752, 0
      %1786 = vmatpush.bf16.msra.mxu0 0
      %1787 = vmatpush.bf16.msra.mxu0 0
      %1788 = vmatpush.bf16.msra.mxu0 0
      %1789 = vmatpush.bf16.msra.mxu0 0
      %1790 = vmatpush.bf16.msra.mxu0 0
      %1791 = vmatpush.bf16.msra.mxu0 %v1773
      %1792 = vmatpush.bf16.msra.mxu0 %v1772
      %1793 = vmatpush.bf16.msra.mxu0 %v1771
      %1794 = vmatmul.bf16.gmra.mxu0 %v1778
      %v1795 = vpop.f32.mrf.mxu0
      %v1796 = vadd.f32 0.0, %v1795
      %v1797 = vpop.f32.mrf.mxu0
      %v1798 = vadd.f32 0.0, %v1797
      %1799 = vmatmul.bf16.gmra.mxu0 %v1780
      %v1800 = vpop.f32.mrf.mxu0
      %v1801 = vadd.f32 0.0, %v1800
      %v1802 = vpop.f32.mrf.mxu0
      %v1803 = vadd.f32 0.0, %v1802
      %1804 = vmatmul.bf16.gmra.mxu0 %v1782
      %v1805 = vpop.f32.mrf.mxu0
      %v1806 = vadd.f32 0.0, %v1805
      %v1807 = vpop.f32.mrf.mxu0
      %v1808 = vadd.f32 0.0, %v1807
      %1809 = vmatmul.bf16.gmra.mxu0 %v1784
      %v1810 = vpop.f32.mrf.mxu0
      %v1811 = vadd.f32 0.0, %v1810
      %v1812 = vpop.f32.mrf.mxu0
      %v1813 = vadd.f32 0.0, %v1812
      %1814 = vdwg.mxu0
      %v1815 = vld [vmem:[%s2] sm:$0x1]
      %v1817 = vperm.slane %v1815, 0
      %v1819 = vmul.f32 %v1796, %v1817
      %v1820 = vmul.f32 %v1798, %v1817
      %v1821 = vmul.f32 %v1801, %v1817
      %v1822 = vmul.f32 %v1803, %v1817
      %v1823 = vmul.f32 %v1806, %v1817
      %v1824 = vmul.f32 %v1808, %v1817
      %v1825 = vmul.f32 %v1811, %v1817
      %v1826 = vmul.f32 %v1813, %v1817
      %v1827 = vld [vmem:[%s3] sm:$0x1]
      %v1829 = vperm.slane %v1827, 0
      %v1831 = vadd.f32 %v1819, %v1829
      %v1832 = vadd.f32 %v1820, %v1829
      %v1833 = vadd.f32 %v1821, %v1829
      %v1834 = vadd.f32 %v1822, %v1829
      %v1835 = vadd.f32 %v1823, %v1829
      %v1836 = vadd.f32 %v1824, %v1829
      %v1837 = vadd.f32 %v1825, %v1829
      %v1838 = vadd.f32 %v1826, %v1829
      %v1839 = vmul.f32 %v1831, 0.2
      %v1840 = vmul.f32 %v1832, 0.2
      %v1841 = vmul.f32 %v1833, 0.2
      %v1842 = vmul.f32 %v1834, 0.2
      %v1843 = vmul.f32 %v1835, 0.2
      %v1844 = vmul.f32 %v1836, 0.2
      %v1845 = vmul.f32 %v1837, 0.2
      %v1846 = vmul.f32 %v1838, 0.2
      %v1847 = vmax.f32 %v1831, %v1839
      %v1848 = vmax.f32 %v1832, %v1840
      %v1849 = vmax.f32 %v1833, %v1841
      %v1850 = vmax.f32 %v1834, %v1842
      %v1851 = vmax.f32 %v1835, %v1843
      %v1852 = vmax.f32 %v1836, %v1844
      %v1853 = vmax.f32 %v1837, %v1845
      %v1854 = vmax.f32 %v1838, %v1846
      %v1855 = vpack.c.bf16 %v1847, %v1847
      %v1856 = vpack.c.bf16 %v1848, %v1848
      %v1857 = vpack.c.bf16 %v1849, %v1849
      %v1858 = vpack.c.bf16 %v1850, %v1850
      %v1859 = vpack.c.bf16 %v1851, %v1851
      %v1860 = vpack.c.bf16 %v1852, %v1852
      %v1861 = vpack.c.bf16 %v1853, %v1853
      %v1862 = vpack.c.bf16 %v1854, %v1854
      %vm1863 = vcmask 60416
      %1864 = vst.msk [vmem:[%s202] sm:$0xf] %vm1863, %v1855
      %1865 = vst.msk [vmem:[%s202 + $0x4] sm:$0xf] %vm1863, %v1856
      %1866 = vst.msk [vmem:[%s202 + $0x8] sm:$0xf] %vm1863, %v1857
      %1867 = vst.msk [vmem:[%s202 + $0xc] sm:$0xf] %vm1863, %v1858
      %1868 = vst.msk [vmem:[%s202 + $0x10] sm:$0xf] %vm1863, %v1859
      %1869 = vst.msk [vmem:[%s202 + $0x14] sm:$0xf] %vm1863, %v1860
      %1870 = vst.msk [vmem:[%s202 + $0x18] sm:$0xf] %vm1863, %v1861
      %1871 = vst.msk [vmem:[%s202 + $0x1c] sm:$0xf] %vm1863, %v1862
      %p1872 = scmp.lt.s32.totalorder %s15, 1
      %s1873 = scalar_select %p1872, %s15, 1
      %s1874 = smul.addr %s1873, 8
      %s1875 = smul.addr %s1874, 4
      %s1876 = scalar_lea.vmem %s4, %s1875
      // Predicated region
      $region37: #{dcgan_d_forward.3} parent=35 // pred_check
        %p1877 = pneg %p122
      $region38: #{dcgan_d_forward.3} parent=35 // pred_check_branch
        %1879 = sbr.rel (%p1877) target = $region40
      $region39: #{dcgan_d_forward.3} parent=35 // pred_region
        _
      $region40: #{dcgan_d_forward.3} parent=35 // pred_fallthru
        _
    $region36: #{dcgan_d_forward.3} parent=5 // pred_fallthru
      _
    %p1880 = scmp.le.s32.totalorder 2, %s10
    // Predicated region
    $region41: #{dcgan_d_forward.3} parent=5 // pred_check
      %p1881 = pneg %p1880
    $region42: #{dcgan_d_forward.3} parent=5 // pred_check_branch
      %1883 = sbr.rel (%p1881) target = $region44
    $region43: #{dcgan_d_forward.3} parent=5 // pred_region
      %s1884 = ssub.s32 %s10, 2
      // Predicated region
      $region45: #{dcgan_d_forward.3} parent=43 // pred_check
        %p1885 = pneg %p128
      $region46: #{dcgan_d_forward.3} parent=43 // pred_check_branch
        %1887 = sbr.rel (%p1885) target = $region48
      $region47: #{dcgan_d_forward.3} parent=43 // pred_region
        %p1888 = scmp.lt.s32.totalorder %s16, 1
        %s1889 = scalar_select %p1888, %s16, 1
        %s1890 = smul.addr %s1889, 8
        %s1891 = smul.addr %s1890, 4
        %s1892 = scalar_lea.vmem %s4, %s1891
      $region48: #{dcgan_d_forward.3} parent=43 // pred_fallthru
        _
    $region44: #{dcgan_d_forward.3} parent=5 // pred_fallthru
      _
  $region6: #{dcgan_d_forward.3} parent=0 // loop_footer
    %s14 = sadd.s32 1, %s10
  $region7: #{dcgan_d_forward.3} parent=0 // loop_footer_branch
    %9 = sbr.rel target = $region3
  $region8: #{dcgan_d_forward.3} parent=0 // loop_exit
    _

// kernel: dcgan_d_forward.4
$region0: #{dcgan_d_forward.4}
  #allocation0 [shape = 'u32[]', space=smem, size = 0x4, offset = 0x4, fixed_abs, tag = 'smem constant byte address 0x4 - core index']
  #allocation1 [shape = 'u32[72,128]{1,0:T(1,128)}', space=vmem, size = 0x9000, scoped, tag = 'internal scratch']
  %s0 = inlined_call_operand.vmem [shape: bf16[8,5,5,8], index: 0, kind: input, shape index: {}]
  %s1 = inlined_call_operand.vmem [shape: bf16[128,16], index: 1, kind: input, shape index: {}]
  %s2 = inlined_call_operand.vmem [shape: f32[1,16], index: 2, kind: input, shape index: {}]
  %s3 = inlined_call_operand.vmem [shape: f32[1,16], index: 3, kind: input, shape index: {}]
  %s4 = inlined_call_operand.vmem [shape: bf16[2,4,4,16], index: 4, kind: output, shape index: {}]
  %s5 = sld [smem:[#allocation0]]
  $region49: #{dcgan_d_forward.4} parent=0
    _
  %s7 = ssub.s32 1, %s5
  %s8 = scalar_select 0, %s7, %s5
  loop: start=0, step=1, limit=4
  $region2: #{dcgan_d_forward.4} parent=0 // loop_pre_header
    _
  $region3: #{dcgan_d_forward.4} parent=0 // loop_header
    %s10 = sphi 0, %s14
    %p11 = scmp.ge.s32.totalorder %s10, 4
    %s20 = sphi 0, %s22
    %s23 = sphi 0, %s20
    %s24 = sphi 0, %s23
    %s40 = sphi 0, %s24
    %s44 = sphi 0, %s44
    %s46 = sphi 0, %s44
    %s47 = sphi 0, %s46
    %s61 = sphi 0, %s47
    %s65 = sphi 0, %s65
    %s67 = sphi 0, %s65
    %s68 = sphi 0, %s67
    %s82 = sphi 0, %s68
    %s86 = sphi 0, %s86
    %s88 = sphi 0, %s86
    %s89 = sphi 0, %s88
    %s103 = sphi 0, %s89
    %s109 = sphi 0, %s111
    %s112 = sphi 0, %s109
    %s113 = sphi 0, %s112
    %s129 = sphi 0, %s113
  $region4: #{dcgan_d_forward.4} parent=0 // loop_header_branch
    %13 = sbr.rel (%p11) target = $region8
  $region5: #{dcgan_d_forward.4} parent=0 // loop_body
    %s15 = ssub.s32 %s10, 1
    %s16 = ssub.s32 %s10, 2
    %s17 = sadd.s32 %s10, 1
    %s18 = ssub.s32 %s10, %s17
    %p19 = scmp.eq.s32.totalorder %s18, 0
    %s21 = sadd.s32 %s20, 1
    %s22 = scalar_select %p19, %s20, %s21
    %p25 = pneg %p19
    %p26 = scmp.eq.s32.totalorder %s10, 1
    %p27 = por %p25, %p26
    %p28 = scmp.ne.s32.totalorder %s20, %s23
    %p29 = scmp.eq.s32.totalorder %s10, 0
    %p30 = por %p28, %p29
    %p31 = scmp.ne.s32.totalorder %s20, %s23
    %p32 = scmp.eq.s32.totalorder %s15, 1
    %p33 = por %p31, %p32
    %p34 = scmp.ne.s32.totalorder %s23, %s24
    %p35 = scmp.eq.s32.totalorder %s15, 0
    %p36 = por %p34, %p35
    %p37 = scmp.ne.s32.totalorder %s23, %s24
    %p38 = scmp.eq.s32.totalorder %s16, 1
    %p39 = por %p37, %p38
    %p41 = scmp.ne.s32.totalorder %s24, %s40
    %p42 = scmp.eq.s32.totalorder %s16, 0
    %p43 = por %p41, %p42
    %s45 = sadd.s32 %s44, 1
    %p48 = scmp.eq.s32.totalorder %s10, 1
    %p49 = scmp.ne.s32.totalorder %s44, %s46
    %p50 = scmp.eq.s32.totalorder %s10, 0
    %p51 = por %p49, %p50
    %p52 = scmp.ne.s32.totalorder %s44, %s46
    %p53 = scmp.eq.s32.totalorder %s15, 1
    %p54 = por %p52, %p53
    %p55 = scmp.ne.s32.totalorder %s46, %s47
    %p56 = scmp.eq.s32.totalorder %s15, 0
    %p57 = por %p55, %p56
    %p58 = scmp.ne.s32.totalorder %s46, %s47
    %p59 = scmp.eq.s32.totalorder %s16, 1
    %p60 = por %p58, %p59
    %p62 = scmp.ne.s32.totalorder %s47, %s61
    %p63 = scmp.eq.s32.totalorder %s16, 0
    %p64 = por %p62, %p63
    %s66 = sadd.s32 %s65, 1
    %p69 = scmp.eq.s32.totalorder %s10, 1
    %p70 = scmp.ne.s32.totalorder %s65, %s67
    %p71 = scmp.eq.s32.totalorder %s10, 0
    %p72 = por %p70, %p71
    %p73 = scmp.ne.s32.totalorder %s65, %s67
    %p74 = scmp.eq.s32.totalorder %s15, 1
    %p75 = por %p73, %p74
    %p76 = scmp.ne.s32.totalorder %s67, %s68
    %p77 = scmp.eq.s32.totalorder %s15, 0
    %p78 = por %p76, %p77
    %p79 = scmp.ne.s32.totalorder %s67, %s68
    %p80 = scmp.eq.s32.totalorder %s16, 1
    %p81 = por %p79, %p80
    %p83 = scmp.ne.s32.totalorder %s68, %s82
    %p84 = scmp.eq.s32.totalorder %s16, 0
    %p85 = por %p83, %p84
    %s87 = sadd.s32 %s86, 1
    %p90 = scmp.eq.s32.totalorder %s10, 1
    %p91 = scmp.ne.s32.totalorder %s86, %s88
    %p92 = scmp.eq.s32.totalorder %s10, 0
    %p93 = por %p91, %p92
    %p94 = scmp.ne.s32.totalorder %s86, %s88
    %p95 = scmp.eq.s32.totalorder %s15, 1
    %p96 = por %p94, %p95
    %p97 = scmp.ne.s32.totalorder %s88, %s89
    %p98 = scmp.eq.s32.totalorder %s15, 0
    %p99 = por %p97, %p98
    %p100 = scmp.ne.s32.totalorder %s88, %s89
    %p101 = scmp.eq.s32.totalorder %s16, 1
    %p102 = por %p100, %p101
    %p104 = scmp.ne.s32.totalorder %s89, %s103
    %p105 = scmp.eq.s32.totalorder %s16, 0
    %p106 = por %p104, %p105
    %s107 = ssub.s32 %s10, %s17
    %p108 = scmp.eq.s32.totalorder %s107, 0
    %s110 = sadd.s32 %s109, 1
    %s111 = scalar_select %p108, %s109, %s110
    %p114 = pneg %p108
    %p115 = scmp.eq.s32.totalorder %s10, 1
    %p116 = por %p114, %p115
    %p117 = scmp.ne.s32.totalorder %s109, %s112
    %p118 = scmp.eq.s32.totalorder %s10, 0
    %p119 = por %p117, %p118
    %p120 = scmp.ne.s32.totalorder %s109, %s112
    %p121 = scmp.eq.s32.totalorder %s15, 1
    %p122 = por %p120, %p121
    %p123 = scmp.ne.s32.totalorder %s112, %s113
    %p124 = scmp.eq.s32.totalorder %s15, 0
    %p125 = por %p123, %p124
    %p126 = scmp.ne.s32.totalorder %s112, %s113
    %p127 = scmp.eq.s32.totalorder %s16, 1
    %p128 = por %p126, %p127
    %p130 = scmp.ne.s32.totalorder %s113, %s129
    %p131 = scmp.eq.s32.totalorder %s16, 0
    %p132 = por %p130, %p131
    %p133 = scmp.le.s32.totalorder 1, %s10
    %p134 = scmp.lt.s32.totalorder %s10, 3
    %p135 = pnand %p133, %p134
    %p136 = pneg %p135
    // Predicated region
    $region9: #{dcgan_d_forward.4} parent=5 // pred_check
      _
    $region10: #{dcgan_d_forward.4} parent=5 // pred_check_branch
      %138 = sbr.rel (%p135) target = $region12
    $region11: #{dcgan_d_forward.4} parent=5 // pred_region
      %s139 = ssub.s32 %s10, 1
      // Predicated region
      $region13: #{dcgan_d_forward.4} parent=11 // pred_check
        %p140 = pneg %p57
      $region14: #{dcgan_d_forward.4} parent=11 // pred_check_branch
        %142 = sbr.rel (%p140) target = $region16
      $region15: #{dcgan_d_forward.4} parent=11 // pred_region
        _
      $region16: #{dcgan_d_forward.4} parent=11 // pred_fallthru
        _
      // Predicated region
      $region17: #{dcgan_d_forward.4} parent=11 // pred_check
        %p143 = pneg %p78
      $region18: #{dcgan_d_forward.4} parent=11 // pred_check_branch
        %145 = sbr.rel (%p143) target = $region20
      $region19: #{dcgan_d_forward.4} parent=11 // pred_region
        _
      $region20: #{dcgan_d_forward.4} parent=11 // pred_fallthru
        _
      // Predicated region
      $region21: #{dcgan_d_forward.4} parent=11 // pred_check
        %p146 = pneg %p99
      $region22: #{dcgan_d_forward.4} parent=11 // pred_check_branch
        %148 = sbr.rel (%p146) target = $region24
      $region23: #{dcgan_d_forward.4} parent=11 // pred_region
        _
      $region24: #{dcgan_d_forward.4} parent=11 // pred_fallthru
        _
    $region12: #{dcgan_d_forward.4} parent=5 // pred_fallthru
      _
    %p149 = scmp.lt.s32.totalorder %s10, 2
    // Predicated region
    $region25: #{dcgan_d_forward.4} parent=5 // pred_check
      %p150 = pneg %p149
    $region26: #{dcgan_d_forward.4} parent=5 // pred_check_branch
      %152 = sbr.rel (%p150) target = $region28
    $region27: #{dcgan_d_forward.4} parent=5 // pred_region
      // Predicated region
      $region29: #{dcgan_d_forward.4} parent=27 // pred_check
        %p153 = pneg %p30
      $region30: #{dcgan_d_forward.4} parent=27 // pred_check_branch
        %155 = sbr.rel (%p153) target = $region32
      $region31: #{dcgan_d_forward.4} parent=27 // pred_region
        %s156 = smul.u32 4, %s10
        %p157 = scmp.lt.s32.totalorder %s156, 7
        %s158 = scalar_select %p157, %s156, 7
        %s159 = smul.addr %s158, 5
        %s160 = smul.addr %s159, 4
        %s161 = scalar_lea.vmem %s0, %s160
        %s162 = smul.u32 4, %s10
      $region32: #{dcgan_d_forward.4} parent=27 // pred_fallthru
        _
    $region28: #{dcgan_d_forward.4} parent=5 // pred_fallthru
      _
    %p163 = scmp.le.s32.totalorder 1, %s10
    %p164 = scmp.lt.s32.totalorder %s10, 3
    %p165 = pnand %p163, %p164
    %p166 = pneg %p165
    // Predicated region
    $region33: #{dcgan_d_forward.4} parent=5 // pred_check
      _
    $region34: #{dcgan_d_forward.4} parent=5 // pred_check_branch
      %168 = sbr.rel (%p165) target = $region36
    $region35: #{dcgan_d_forward.4} parent=5 // pred_region
      %s169 = ssub.s32 %s10, 1
      %s170 = smul.u32 4, %s15
      %p171 = scmp.lt.s32.totalorder %s170, 7
      %s172 = scalar_select %p171, %s170, 7
      %s173 = smul.addr %s172, 5
      %s174 = smul.addr %s173, 4
      %s175 = scalar_lea.vmem %s0, %s174
      %p176 = pneg %p36
      %p177 = pneg %p33
      %p178 = pneg %p57
      %p179 = pneg %p54
      %p180 = pneg %p78
      %p181 = pneg %p75
      %p182 = pneg %p99
      %p183 = pneg %p96
      %p184 = pneg %p125
      %p185 = pneg %p122
      %p186 = scmp.lt.s32.totalorder %s15, 1
      %s187 = scalar_select %p186, %s15, 1
      %s188 = smul.addr %s187, 4
      %s189 = smul.addr %s188, 2
      %s190 = scalar_lea.vmem %s4, %s189
      %s191 = smul.u32 4, %s15
      %p192 = scmp.lt.s32.totalorder %s191, 7
      %s193 = scalar_select %p192, %s191, 7
      %s194 = smul.addr %s193, 5
      %s195 = smul.addr %s194, 4
      %s196 = scalar_lea.vmem %s0, %s195
      %s197 = smul.u32 4, %s15
      %p198 = scmp.lt.s32.totalorder %s15, 1
      %s199 = scalar_select %p198, %s15, 1
      %s200 = smul.addr %s199, 4
      %s201 = smul.addr %s200, 2
      %s202 = scalar_lea.vmem %s4, %s201
      %v203 = vld [vmem:[%s196] sm:$0x3]
      %v204 = vld [vmem:[%s196 + $0x4] sm:$0x3]
      %v205 = vld [vmem:[%s196 + $0x8] sm:$0x3]
      %v206 = vld [vmem:[%s196 + $0xc] sm:$0x3]
      %s207 = scalar_lea.vmem %s196, 20
      %v208 = vld [vmem:[%s207] sm:$0x3]
      %v209 = vld [vmem:[%s207 + $0x4] sm:$0x3]
      %v210 = vld [vmem:[%s207 + $0x8] sm:$0x3]
      %v211 = vld [vmem:[%s207 + $0xc] sm:$0x3]
      %v212 = vld [vmem:[%s196] sm:$0x7]
      %v213 = vld [vmem:[%s196 + $0x4] sm:$0x7]
      %v214 = vld [vmem:[%s196 + $0x8] sm:$0x7]
      %v215 = vld [vmem:[%s196 + $0xc] sm:$0x7]
      %v220 = vrot.slane %v212, 2
      %v221 = vrot.slane %v213, 2
      %v222 = vrot.slane %v214, 2
      %v223 = vrot.slane %v215, 2
      %vm224 = vcmask 1041408
      %v227 = vsel %vm224, %v212, %v220
      %vm228 = vcmask 1043458
      %v229 = vsel %vm228, %v212, %v220
      %v231 = vrot.slane %v229, 2
      %v234 = vsel %vm224, %v213, %v221
      %v235 = vsel %vm228, %v213, %v221
      %v237 = vrot.slane %v235, 2
      %v240 = vsel %vm224, %v214, %v222
      %v241 = vsel %vm228, %v214, %v222
      %v243 = vrot.slane %v241, 2
      %v246 = vsel %vm224, %v215, %v223
      %v247 = vsel %vm228, %v215, %v223
      %v249 = vrot.slane %v247, 2
      %vm250 = vsmask.f32 1280
      %vm251 = vsmask.f32 3336
      %vm252 = vmor %vm250, %vm251
      %vm253 = vsmask.f32 5392
      %vm254 = vmor %vm252, %vm253
      %vm255 = vsmask.f32 7448
      %vm256 = vmor %vm254, %vm255
      %v257 = vshrl.u32 %v227, 16
      %v259 = vrot.slane %v257, 6
      %v260 = vshll.u32 %v227, 16
      %v262 = vrot.slane %v260, 7
      %v263 = vor.u32 %v259, %v262
      %v264 = vrot.slane %v263, 2
      %v266 = vshll.u32 %v231, 16
      %v268 = vrot.slane %v266, 7
      %v269 = vsel %vm256, %v264, %v268
      %v270 = vshrl.u32 %v234, 16
      %v272 = vrot.slane %v270, 6
      %v273 = vshll.u32 %v234, 16
      %v275 = vrot.slane %v273, 7
      %v276 = vor.u32 %v272, %v275
      %v277 = vrot.slane %v276, 2
      %v279 = vshll.u32 %v237, 16
      %v281 = vrot.slane %v279, 7
      %v282 = vsel %vm256, %v277, %v281
      %v283 = vshrl.u32 %v240, 16
      %v285 = vrot.slane %v283, 6
      %v286 = vshll.u32 %v240, 16
      %v288 = vrot.slane %v286, 7
      %v289 = vor.u32 %v285, %v288
      %v290 = vrot.slane %v289, 2
      %v292 = vshll.u32 %v243, 16
      %v294 = vrot.slane %v292, 7
      %v295 = vsel %vm256, %v290, %v294
      %v296 = vshrl.u32 %v246, 16
      %v298 = vrot.slane %v296, 6
      %v299 = vshll.u32 %v246, 16
      %v301 = vrot.slane %v299, 7
      %v302 = vor.u32 %v298, %v301
      %v303 = vrot.slane %v302, 2
      %v305 = vshll.u32 %v249, 16
      %v307 = vrot.slane %v305, 7
      %v308 = vsel %vm256, %v303, %v307
      %v309 = vld [vmem:[%s207] sm:$0x7]
      %v310 = vld [vmem:[%s207 + $0x4] sm:$0x7]
      %v311 = vld [vmem:[%s207 + $0x8] sm:$0x7]
      %v312 = vld [vmem:[%s207 + $0xc] sm:$0x7]
      %v317 = vrot.slane %v309, 2
      %v318 = vrot.slane %v310, 2
      %v319 = vrot.slane %v311, 2
      %v320 = vrot.slane %v312, 2
      %v323 = vsel %vm224, %v309, %v317
      %v324 = vsel %vm228, %v309, %v317
      %v326 = vrot.slane %v324, 2
      %v329 = vsel %vm224, %v310, %v318
      %v330 = vsel %vm228, %v310, %v318
      %v332 = vrot.slane %v330, 2
      %v335 = vsel %vm224, %v311, %v319
      %v336 = vsel %vm228, %v311, %v319
      %v338 = vrot.slane %v336, 2
      %v341 = vsel %vm224, %v312, %v320
      %v342 = vsel %vm228, %v312, %v320
      %v344 = vrot.slane %v342, 2
      %v345 = vshrl.u32 %v323, 16
      %v347 = vrot.slane %v345, 6
      %v348 = vshll.u32 %v323, 16
      %v350 = vrot.slane %v348, 7
      %v351 = vor.u32 %v347, %v350
      %v352 = vrot.slane %v351, 2
      %v354 = vshll.u32 %v326, 16
      %v356 = vrot.slane %v354, 7
      %v357 = vsel %vm256, %v352, %v356
      %v358 = vshrl.u32 %v329, 16
      %v360 = vrot.slane %v358, 6
      %v361 = vshll.u32 %v329, 16
      %v363 = vrot.slane %v361, 7
      %v364 = vor.u32 %v360, %v363
      %v365 = vrot.slane %v364, 2
      %v367 = vshll.u32 %v332, 16
      %v369 = vrot.slane %v367, 7
      %v370 = vsel %vm256, %v365, %v369
      %v371 = vshrl.u32 %v335, 16
      %v373 = vrot.slane %v371, 6
      %v374 = vshll.u32 %v335, 16
      %v376 = vrot.slane %v374, 7
      %v377 = vor.u32 %v373, %v376
      %v378 = vrot.slane %v377, 2
      %v380 = vshll.u32 %v338, 16
      %v382 = vrot.slane %v380, 7
      %v383 = vsel %vm256, %v378, %v382
      %v384 = vshrl.u32 %v341, 16
      %v386 = vrot.slane %v384, 6
      %v387 = vshll.u32 %v341, 16
      %v389 = vrot.slane %v387, 7
      %v390 = vor.u32 %v386, %v389
      %v391 = vrot.slane %v390, 2
      %v393 = vshll.u32 %v344, 16
      %v395 = vrot.slane %v393, 7
      %v396 = vsel %vm256, %v391, %v395
      %s397 = scalar_lea.vmem %s196, 40
      %v398 = vld [vmem:[%s397] sm:$0x3]
      %v399 = vld [vmem:[%s397 + $0x4] sm:$0x3]
      %v400 = vld [vmem:[%s397 + $0x8] sm:$0x3]
      %v401 = vld [vmem:[%s397 + $0xc] sm:$0x3]
      %s402 = scalar_lea.vmem %s196, 60
      %v403 = vld [vmem:[%s402] sm:$0x3]
      %v404 = vld [vmem:[%s402 + $0x4] sm:$0x3]
      %v405 = vld [vmem:[%s402 + $0x8] sm:$0x3]
      %v406 = vld [vmem:[%s402 + $0xc] sm:$0x3]
      %v407 = vld [vmem:[%s397] sm:$0x7]
      %v408 = vld [vmem:[%s397 + $0x4] sm:$0x7]
      %v409 = vld [vmem:[%s397 + $0x8] sm:$0x7]
      %v410 = vld [vmem:[%s397 + $0xc] sm:$0x7]
      %v415 = vrot.slane %v407, 2
      %v416 = vrot.slane %v408, 2
      %v417 = vrot.slane %v409, 2
      %v418 = vrot.slane %v410, 2
      %v421 = vsel %vm224, %v407, %v415
      %v422 = vsel %vm228, %v407, %v415
      %v424 = vrot.slane %v422, 2
      %v427 = vsel %vm224, %v408, %v416
      %v428 = vsel %vm228, %v408, %v416
      %v430 = vrot.slane %v428, 2
      %v433 = vsel %vm224, %v409, %v417
      %v434 = vsel %vm228, %v409, %v417
      %v436 = vrot.slane %v434, 2
      %v439 = vsel %vm224, %v410, %v418
      %v440 = vsel %vm228, %v410, %v418
      %v442 = vrot.slane %v440, 2
      %v443 = vshrl.u32 %v421, 16
      %v445 = vrot.slane %v443, 6
      %v446 = vshll.u32 %v421, 16
      %v448 = vrot.slane %v446, 7
      %v449 = vor.u32 %v445, %v448
      %v450 = vrot.slane %v449, 2
      %v452 = vshll.u32 %v424, 16
      %v454 = vrot.slane %v452, 7
      %v455 = vsel %vm256, %v450, %v454
      %v456 = vshrl.u32 %v427, 16
      %v458 = vrot.slane %v456, 6
      %v459 = vshll.u32 %v427, 16
      %v461 = vrot.slane %v459, 7
      %v462 = vor.u32 %v458, %v461
      %v463 = vrot.slane %v462, 2
      %v465 = vshll.u32 %v430, 16
      %v467 = vrot.slane %v465, 7
      %v468 = vsel %vm256, %v463, %v467
      %v469 = vshrl.u32 %v433, 16
      %v471 = vrot.slane %v469, 6
      %v472 = vshll.u32 %v433, 16
      %v474 = vrot.slane %v472, 7
      %v475 = vor.u32 %v471, %v474
      %v476 = vrot.slane %v475, 2
      %v478 = vshll.u32 %v436, 16
      %v480 = vrot.slane %v478, 7
      %v481 = vsel %vm256, %v476, %v480
      %v482 = vshrl.u32 %v439, 16
      %v484 = vrot.slane %v482, 6
      %v485 = vshll.u32 %v439, 16
      %v487 = vrot.slane %v485, 7
      %v488 = vor.u32 %v484, %v487
      %v489 = vrot.slane %v488, 2
      %v491 = vshll.u32 %v442, 16
      %v493 = vrot.slane %v491, 7
      %v494 = vsel %vm256, %v489, %v493
      %v495 = vld [vmem:[%s402] sm:$0x7]
      %v496 = vld [vmem:[%s402 + $0x4] sm:$0x7]
      %v497 = vld [vmem:[%s402 + $0x8] sm:$0x7]
      %v498 = vld [vmem:[%s402 + $0xc] sm:$0x7]
      %v503 = vrot.slane %v495, 2
      %v504 = vrot.slane %v496, 2
      %v505 = vrot.slane %v497, 2
      %v506 = vrot.slane %v498, 2
      %v509 = vsel %vm224, %v495, %v503
      %v510 = vsel %vm228, %v495, %v503
      %v512 = vrot.slane %v510, 2
      %v515 = vsel %vm224, %v496, %v504
      %v516 = vsel %vm228, %v496, %v504
      %v518 = vrot.slane %v516, 2
      %v521 = vsel %vm224, %v497, %v505
      %v522 = vsel %vm228, %v497, %v505
      %v524 = vrot.slane %v522, 2
      %v527 = vsel %vm224, %v498, %v506
      %v528 = vsel %vm228, %v498, %v506
      %v530 = vrot.slane %v528, 2
      %v531 = vshrl.u32 %v509, 16
      %v533 = vrot.slane %v531, 6
      %v534 = vshll.u32 %v509, 16
      %v536 = vrot.slane %v534, 7
      %v537 = vor.u32 %v533, %v536
      %v538 = vrot.slane %v537, 2
      %v540 = vshll.u32 %v512, 16
      %v542 = vrot.slane %v540, 7
      %v543 = vsel %vm256, %v538, %v542
      %v544 = vshrl.u32 %v515, 16
      %v546 = vrot.slane %v544, 6
      %v547 = vshll.u32 %v515, 16
      %v549 = vrot.slane %v547, 7
      %v550 = vor.u32 %v546, %v549
      %v551 = vrot.slane %v550, 2
      %v553 = vshll.u32 %v518, 16
      %v555 = vrot.slane %v553, 7
      %v556 = vsel %vm256, %v551, %v555
      %v557 = vshrl.u32 %v521, 16
      %v559 = vrot.slane %v557, 6
      %v560 = vshll.u32 %v521, 16
      %v562 = vrot.slane %v560, 7
      %v563 = vor.u32 %v559, %v562
      %v564 = vrot.slane %v563, 2
      %v566 = vshll.u32 %v524, 16
      %v568 = vrot.slane %v566, 7
      %v569 = vsel %vm256, %v564, %v568
      %v570 = vshrl.u32 %v527, 16
      %v572 = vrot.slane %v570, 6
      %v573 = vshll.u32 %v527, 16
      %v575 = vrot.slane %v573, 7
      %v576 = vor.u32 %v572, %v575
      %v577 = vrot.slane %v576, 2
      %v579 = vshll.u32 %v530, 16
      %v581 = vrot.slane %v579, 7
      %v582 = vsel %vm256, %v577, %v581
      %s583 = scalar_lea.vmem %s196, 4
      %v584 = vld [vmem:[%s583] sm:$0x3]
      %v585 = vld [vmem:[%s583 + $0x4] sm:$0x3]
      %v586 = vld [vmem:[%s583 + $0x8] sm:$0x3]
      %v587 = vld [vmem:[%s583 + $0xc] sm:$0x3]
      %s588 = scalar_lea.vmem %s196, 24
      %v589 = vld [vmem:[%s588] sm:$0x3]
      %v590 = vld [vmem:[%s588 + $0x4] sm:$0x3]
      %v591 = vld [vmem:[%s588 + $0x8] sm:$0x3]
      %v592 = vld [vmem:[%s588 + $0xc] sm:$0x3]
      %v593 = vld [vmem:[%s583] sm:$0x7]
      %v594 = vld [vmem:[%s583 + $0x4] sm:$0x7]
      %v595 = vld [vmem:[%s583 + $0x8] sm:$0x7]
      %v596 = vld [vmem:[%s583 + $0xc] sm:$0x7]
      %v601 = vrot.slane %v593, 2
      %v602 = vrot.slane %v594, 2
      %v603 = vrot.slane %v595, 2
      %v604 = vrot.slane %v596, 2
      %v607 = vsel %vm224, %v593, %v601
      %v608 = vsel %vm228, %v593, %v601
      %v610 = vrot.slane %v608, 2
      %v613 = vsel %vm224, %v594, %v602
      %v614 = vsel %vm228, %v594, %v602
      %v616 = vrot.slane %v614, 2
      %v619 = vsel %vm224, %v595, %v603
      %v620 = vsel %vm228, %v595, %v603
      %v622 = vrot.slane %v620, 2
      %v625 = vsel %vm224, %v596, %v604
      %v626 = vsel %vm228, %v596, %v604
      %v628 = vrot.slane %v626, 2
      %v629 = vshrl.u32 %v607, 16
      %v631 = vrot.slane %v629, 6
      %v632 = vshll.u32 %v607, 16
      %v634 = vrot.slane %v632, 7
      %v635 = vor.u32 %v631, %v634
      %v636 = vrot.slane %v635, 2
      %v638 = vshll.u32 %v610, 16
      %v640 = vrot.slane %v638, 7
      %v641 = vsel %vm256, %v636, %v640
      %v642 = vshrl.u32 %v613, 16
      %v644 = vrot.slane %v642, 6
      %v645 = vshll.u32 %v613, 16
      %v647 = vrot.slane %v645, 7
      %v648 = vor.u32 %v644, %v647
      %v649 = vrot.slane %v648, 2
      %v651 = vshll.u32 %v616, 16
      %v653 = vrot.slane %v651, 7
      %v654 = vsel %vm256, %v649, %v653
      %v655 = vshrl.u32 %v619, 16
      %v657 = vrot.slane %v655, 6
      %v658 = vshll.u32 %v619, 16
      %v660 = vrot.slane %v658, 7
      %v661 = vor.u32 %v657, %v660
      %v662 = vrot.slane %v661, 2
      %v664 = vshll.u32 %v622, 16
      %v666 = vrot.slane %v664, 7
      %v667 = vsel %vm256, %v662, %v666
      %v668 = vshrl.u32 %v625, 16
      %v670 = vrot.slane %v668, 6
      %v671 = vshll.u32 %v625, 16
      %v673 = vrot.slane %v671, 7
      %v674 = vor.u32 %v670, %v673
      %v675 = vrot.slane %v674, 2
      %v677 = vshll.u32 %v628, 16
      %v679 = vrot.slane %v677, 7
      %v680 = vsel %vm256, %v675, %v679
      %v681 = vld [vmem:[%s588] sm:$0x7]
      %v682 = vld [vmem:[%s588 + $0x4] sm:$0x7]
      %v683 = vld [vmem:[%s588 + $0x8] sm:$0x7]
      %v684 = vld [vmem:[%s588 + $0xc] sm:$0x7]
      %v689 = vrot.slane %v681, 2
      %v690 = vrot.slane %v682, 2
      %v691 = vrot.slane %v683, 2
      %v692 = vrot.slane %v684, 2
      %v695 = vsel %vm224, %v681, %v689
      %v696 = vsel %vm228, %v681, %v689
      %v698 = vrot.slane %v696, 2
      %v701 = vsel %vm224, %v682, %v690
      %v702 = vsel %vm228, %v682, %v690
      %v704 = vrot.slane %v702, 2
      %v707 = vsel %vm224, %v683, %v691
      %v708 = vsel %vm228, %v683, %v691
      %v710 = vrot.slane %v708, 2
      %v713 = vsel %vm224, %v684, %v692
      %v714 = vsel %vm228, %v684, %v692
      %v716 = vrot.slane %v714, 2
      %v717 = vshrl.u32 %v695, 16
      %v719 = vrot.slane %v717, 6
      %v720 = vshll.u32 %v695, 16
      %v722 = vrot.slane %v720, 7
      %v723 = vor.u32 %v719, %v722
      %v724 = vrot.slane %v723, 2
      %v726 = vshll.u32 %v698, 16
      %v728 = vrot.slane %v726, 7
      %v729 = vsel %vm256, %v724, %v728
      %v730 = vshrl.u32 %v701, 16
      %v732 = vrot.slane %v730, 6
      %v733 = vshll.u32 %v701, 16
      %v735 = vrot.slane %v733, 7
      %v736 = vor.u32 %v732, %v735
      %v737 = vrot.slane %v736, 2
      %v739 = vshll.u32 %v704, 16
      %v741 = vrot.slane %v739, 7
      %v742 = vsel %vm256, %v737, %v741
      %v743 = vshrl.u32 %v707, 16
      %v745 = vrot.slane %v743, 6
      %v746 = vshll.u32 %v707, 16
      %v748 = vrot.slane %v746, 7
      %v749 = vor.u32 %v745, %v748
      %v750 = vrot.slane %v749, 2
      %v752 = vshll.u32 %v710, 16
      %v754 = vrot.slane %v752, 7
      %v755 = vsel %vm256, %v750, %v754
      %v756 = vshrl.u32 %v713, 16
      %v758 = vrot.slane %v756, 6
      %v759 = vshll.u32 %v713, 16
      %v761 = vrot.slane %v759, 7
      %v762 = vor.u32 %v758, %v761
      %v763 = vrot.slane %v762, 2
      %v765 = vshll.u32 %v716, 16
      %v767 = vrot.slane %v765, 7
      %v768 = vsel %vm256, %v763, %v767
      %s769 = scalar_lea.vmem %s196, 44
      %v770 = vld [vmem:[%s769] sm:$0x3]
      %v771 = vld [vmem:[%s769 + $0x4] sm:$0x3]
      %v772 = vld [vmem:[%s769 + $0x8] sm:$0x3]
      %v773 = vld [vmem:[%s769 + $0xc] sm:$0x3]
      %s774 = scalar_lea.vmem %s196, 64
      %v775 = vld [vmem:[%s774] sm:$0x3]
      %v776 = vld [vmem:[%s774 + $0x4] sm:$0x3]
      %v777 = vld [vmem:[%s774 + $0x8] sm:$0x3]
      %v778 = vld [vmem:[%s774 + $0xc] sm:$0x3]
      %v779 = vld [vmem:[%s769] sm:$0x7]
      %v780 = vld [vmem:[%s769 + $0x4] sm:$0x7]
      %v781 = vld [vmem:[%s769 + $0x8] sm:$0x7]
      %v782 = vld [vmem:[%s769 + $0xc] sm:$0x7]
      %v787 = vrot.slane %v779, 2
      %v788 = vrot.slane %v780, 2
      %v789 = vrot.slane %v781, 2
      %v790 = vrot.slane %v782, 2
      %v793 = vsel %vm224, %v779, %v787
      %v794 = vsel %vm228, %v779, %v787
      %v796 = vrot.slane %v794, 2
      %v799 = vsel %vm224, %v780, %v788
      %v800 = vsel %vm228, %v780, %v788
      %v802 = vrot.slane %v800, 2
      %v805 = vsel %vm224, %v781, %v789
      %v806 = vsel %vm228, %v781, %v789
      %v808 = vrot.slane %v806, 2
      %v811 = vsel %vm224, %v782, %v790
      %v812 = vsel %vm228, %v782, %v790
      %v814 = vrot.slane %v812, 2
      %v815 = vshrl.u32 %v793, 16
      %v817 = vrot.slane %v815, 6
      %v818 = vshll.u32 %v793, 16
      %v820 = vrot.slane %v818, 7
      %v821 = vor.u32 %v817, %v820
      %v822 = vrot.slane %v821, 2
      %v824 = vshll.u32 %v796, 16
      %v826 = vrot.slane %v824, 7
      %v827 = vsel %vm256, %v822, %v826
      %v828 = vshrl.u32 %v799, 16
      %v830 = vrot.slane %v828, 6
      %v831 = vshll.u32 %v799, 16
      %v833 = vrot.slane %v831, 7
      %v834 = vor.u32 %v830, %v833
      %v835 = vrot.slane %v834, 2
      %v837 = vshll.u32 %v802, 16
      %v839 = vrot.slane %v837, 7
      %v840 = vsel %vm256, %v835, %v839
      %v841 = vshrl.u32 %v805, 16
      %v843 = vrot.slane %v841, 6
      %v844 = vshll.u32 %v805, 16
      %v846 = vrot.slane %v844, 7
      %v847 = vor.u32 %v843, %v846
      %v848 = vrot.slane %v847, 2
      %v850 = vshll.u32 %v808, 16
      %v852 = vrot.slane %v850, 7
      %v853 = vsel %vm256, %v848, %v852
      %v854 = vshrl.u32 %v811, 16
      %v856 = vrot.slane %v854, 6
      %v857 = vshll.u32 %v811, 16
      %v859 = vrot.slane %v857, 7
      %v860 = vor.u32 %v856, %v859
      %v861 = vrot.slane %v860, 2
      %v863 = vshll.u32 %v814, 16
      %v865 = vrot.slane %v863, 7
      %v866 = vsel %vm256, %v861, %v865
      %v867 = vld [vmem:[%s774] sm:$0x7]
      %v868 = vld [vmem:[%s774 + $0x4] sm:$0x7]
      %v869 = vld [vmem:[%s774 + $0x8] sm:$0x7]
      %v870 = vld [vmem:[%s774 + $0xc] sm:$0x7]
      %v875 = vrot.slane %v867, 2
      %v876 = vrot.slane %v868, 2
      %v877 = vrot.slane %v869, 2
      %v878 = vrot.slane %v870, 2
      %v881 = vsel %vm224, %v867, %v875
      %v882 = vsel %vm228, %v867, %v875
      %v884 = vrot.slane %v882, 2
      %v887 = vsel %vm224, %v868, %v876
      %v888 = vsel %vm228, %v868, %v876
      %v890 = vrot.slane %v888, 2
      %v893 = vsel %vm224, %v869, %v877
      %v894 = vsel %vm228, %v869, %v877
      %v896 = vrot.slane %v894, 2
      %v899 = vsel %vm224, %v870, %v878
      %v900 = vsel %vm228, %v870, %v878
      %v902 = vrot.slane %v900, 2
      %v903 = vshrl.u32 %v881, 16
      %v905 = vrot.slane %v903, 6
      %v906 = vshll.u32 %v881, 16
      %v908 = vrot.slane %v906, 7
      %v909 = vor.u32 %v905, %v908
      %v910 = vrot.slane %v909, 2
      %v912 = vshll.u32 %v884, 16
      %v914 = vrot.slane %v912, 7
      %v915 = vsel %vm256, %v910, %v914
      %v916 = vshrl.u32 %v887, 16
      %v918 = vrot.slane %v916, 6
      %v919 = vshll.u32 %v887, 16
      %v921 = vrot.slane %v919, 7
      %v922 = vor.u32 %v918, %v921
      %v923 = vrot.slane %v922, 2
      %v925 = vshll.u32 %v890, 16
      %v927 = vrot.slane %v925, 7
      %v928 = vsel %vm256, %v923, %v927
      %v929 = vshrl.u32 %v893, 16
      %v931 = vrot.slane %v929, 6
      %v932 = vshll.u32 %v893, 16
      %v934 = vrot.slane %v932, 7
      %v935 = vor.u32 %v931, %v934
      %v936 = vrot.slane %v935, 2
      %v938 = vshll.u32 %v896, 16
      %v940 = vrot.slane %v938, 7
      %v941 = vsel %vm256, %v936, %v940
      %v942 = vshrl.u32 %v899, 16
      %v944 = vrot.slane %v942, 6
      %v945 = vshll.u32 %v899, 16
      %v947 = vrot.slane %v945, 7
      %v948 = vor.u32 %v944, %v947
      %v949 = vrot.slane %v948, 2
      %v951 = vshll.u32 %v902, 16
      %v953 = vrot.slane %v951, 7
      %v954 = vsel %vm256, %v949, %v953
      %956 = vst [vmem:[#allocation1] ss:$4 sm:$0xff] %v203
      %s958 = scalar_lea.vmem [#allocation1], 1
      %959 = vst [vmem:[%s958] ss:$4 sm:$0xff] %v204
      %s961 = scalar_lea.vmem [#allocation1], 2
      %962 = vst [vmem:[%s961] ss:$4 sm:$0xff] %v205
      %s964 = scalar_lea.vmem [#allocation1], 3
      %965 = vst [vmem:[%s964] ss:$4 sm:$0xff] %v206
      %v966 = vld.sshfl [vmem:[#allocation1] sm:$0xff pattern:$0x73625140]
      %968 = vst [vmem:[#allocation1] ss:$4 sm:$0xff] %v208
      %s970 = scalar_lea.vmem [#allocation1], 1
      %971 = vst [vmem:[%s970] ss:$4 sm:$0xff] %v209
      %s973 = scalar_lea.vmem [#allocation1], 2
      %974 = vst [vmem:[%s973] ss:$4 sm:$0xff] %v210
      %s976 = scalar_lea.vmem [#allocation1], 3
      %977 = vst [vmem:[%s976] ss:$4 sm:$0xff] %v211
      %v978 = vld.sshfl [vmem:[#allocation1] sm:$0xff pattern:$0x73625140]
      %980 = vrot.lane.b32.xlu0 %v978, 8
      %v981 = vpop.permute.xlu0 %980
      %983 = vst [vmem:[#allocation1] ss:$4 sm:$0xff] %v269
      %s985 = scalar_lea.vmem [#allocation1], 1
      %986 = vst [vmem:[%s985] ss:$4 sm:$0xff] %v282
      %s988 = scalar_lea.vmem [#allocation1], 2
      %989 = vst [vmem:[%s988] ss:$4 sm:$0xff] %v295
      %s991 = scalar_lea.vmem [#allocation1], 3
      %992 = vst [vmem:[%s991] ss:$4 sm:$0xff] %v308
      %v993 = vld.sshfl [vmem:[#allocation1] sm:$0xff pattern:$0x73625140]
      %995 = vrot.lane.b32.xlu0 %v993, 16
      %v996 = vpop.permute.xlu0 %995
      %998 = vst [vmem:[#allocation1] ss:$4 sm:$0xff] %v357
      %s1000 = scalar_lea.vmem [#allocation1], 1
      %1001 = vst [vmem:[%s1000] ss:$4 sm:$0xff] %v370
      %s1003 = scalar_lea.vmem [#allocation1], 2
      %1004 = vst [vmem:[%s1003] ss:$4 sm:$0xff] %v383
      %s1006 = scalar_lea.vmem [#allocation1], 3
      %1007 = vst [vmem:[%s1006] ss:$4 sm:$0xff] %v396
      %v1008 = vld.sshfl [vmem:[#allocation1] sm:$0xff pattern:$0x73625140]
      %1010 = vrot.lane.b32.xlu0 %v1008, 24
      %v1011 = vpop.permute.xlu0 %1010
      %1013 = vst [vmem:[#allocation1] ss:$4 sm:$0xff] %v398
      %s1015 = scalar_lea.vmem [#allocation1], 1
      %1016 = vst [vmem:[%s1015] ss:$4 sm:$0xff] %v399
      %s1018 = scalar_lea.vmem [#allocation1], 2
      %1019 = vst [vmem:[%s1018] ss:$4 sm:$0xff] %v400
      %s1021 = scalar_lea.vmem [#allocation1], 3
      %1022 = vst [vmem:[%s1021] ss:$4 sm:$0xff] %v401
      %v1023 = vld.sshfl [vmem:[#allocation1] sm:$0xff pattern:$0x73625140]
      %1025 = vrot.lane.b32.xlu0 %v1023, 32
      %v1026 = vpop.permute.xlu0 %1025
      %1028 = vst [vmem:[#allocation1] ss:$4 sm:$0xff] %v403
      %s1030 = scalar_lea.vmem [#allocation1], 1
      %1031 = vst [vmem:[%s1030] ss:$4 sm:$0xff] %v404
      %s1033 = scalar_lea.vmem [#allocation1], 2
      %1034 = vst [vmem:[%s1033] ss:$4 sm:$0xff] %v405
      %s1036 = scalar_lea.vmem [#allocation1], 3
      %1037 = vst [vmem:[%s1036] ss:$4 sm:$0xff] %v406
      %v1038 = vld.sshfl [vmem:[#allocation1] sm:$0xff pattern:$0x73625140]
      %1040 = vrot.lane.b32.xlu0 %v1038, 40
      %v1041 = vpop.permute.xlu0 %1040
      %1043 = vst [vmem:[#allocation1] ss:$4 sm:$0xff] %v455
      %s1045 = scalar_lea.vmem [#allocation1], 1
      %1046 = vst [vmem:[%s1045] ss:$4 sm:$0xff] %v468
      %s1048 = scalar_lea.vmem [#allocation1], 2
      %1049 = vst [vmem:[%s1048] ss:$4 sm:$0xff] %v481
      %s1051 = scalar_lea.vmem [#allocation1], 3
      %1052 = vst [vmem:[%s1051] ss:$4 sm:$0xff] %v494
      %v1053 = vld.sshfl [vmem:[#allocation1] sm:$0xff pattern:$0x73625140]
      %1055 = vrot.lane.b32.xlu0 %v1053, 48
      %v1056 = vpop.permute.xlu0 %1055
      %1058 = vst [vmem:[#allocation1] ss:$4 sm:$0xff] %v543
      %s1060 = scalar_lea.vmem [#allocation1], 1
      %1061 = vst [vmem:[%s1060] ss:$4 sm:$0xff] %v556
      %s1063 = scalar_lea.vmem [#allocation1], 2
      %1064 = vst [vmem:[%s1063] ss:$4 sm:$0xff] %v569
      %s1066 = scalar_lea.vmem [#allocation1], 3
      %1067 = vst [vmem:[%s1066] ss:$4 sm:$0xff] %v582
      %v1068 = vld.sshfl [vmem:[#allocation1] sm:$0xff pattern:$0x73625140]
      %1070 = vrot.lane.b32.xlu0 %v1068, 56
      %v1071 = vpop.permute.xlu0 %1070
      %1073 = vst [vmem:[#allocation1] ss:$4 sm:$0xff] %v584
      %s1075 = scalar_lea.vmem [#allocation1], 1
      %1076 = vst [vmem:[%s1075] ss:$4 sm:$0xff] %v585
      %s1078 = scalar_lea.vmem [#allocation1], 2
      %1079 = vst [vmem:[%s1078] ss:$4 sm:$0xff] %v586
      %s1081 = scalar_lea.vmem [#allocation1], 3
      %1082 = vst [vmem:[%s1081] ss:$4 sm:$0xff] %v587
      %v1083 = vld.sshfl [vmem:[#allocation1] sm:$0xff pattern:$0x73625140]
      %1085 = vrot.lane.b32.xlu0 %v1083, 64
      %v1086 = vpop.permute.xlu0 %1085
      %1088 = vst [vmem:[#allocation1] ss:$4 sm:$0xff] %v589
      %s1090 = scalar_lea.vmem [#allocation1], 1
      %1091 = vst [vmem:[%s1090] ss:$4 sm:$0xff] %v590
      %s1093 = scalar_lea.vmem [#allocation1], 2
      %1094 = vst [vmem:[%s1093] ss:$4 sm:$0xff] %v591
      %s1096 = scalar_lea.vmem [#allocation1], 3
      %1097 = vst [vmem:[%s1096] ss:$4 sm:$0xff] %v592
      %v1098 = vld.sshfl [vmem:[#allocation1] sm:$0xff pattern:$0x73625140]
      %1100 = vrot.lane.b32.xlu0 %v1098, 72
      %v1101 = vpop.permute.xlu0 %1100
      %1103 = vst [vmem:[#allocation1] ss:$4 sm:$0xff] %v641
      %s1105 = scalar_lea.vmem [#allocation1], 1
      %1106 = vst [vmem:[%s1105] ss:$4 sm:$0xff] %v654
      %s1108 = scalar_lea.vmem [#allocation1], 2
      %1109 = vst [vmem:[%s1108] ss:$4 sm:$0xff] %v667
      %s1111 = scalar_lea.vmem [#allocation1], 3
      %1112 = vst [vmem:[%s1111] ss:$4 sm:$0xff] %v680
      %v1113 = vld.sshfl [vmem:[#allocation1] sm:$0xff pattern:$0x73625140]
      %1115 = vrot.lane.b32.xlu0 %v1113, 80
      %v1116 = vpop.permute.xlu0 %1115
      %1118 = vst [vmem:[#allocation1] ss:$4 sm:$0xff] %v729
      %s1120 = scalar_lea.vmem [#allocation1], 1
      %1121 = vst [vmem:[%s1120] ss:$4 sm:$0xff] %v742
      %s1123 = scalar_lea.vmem [#allocation1], 2
      %1124 = vst [vmem:[%s1123] ss:$4 sm:$0xff] %v755
      %s1126 = scalar_lea.vmem [#allocation1], 3
      %1127 = vst [vmem:[%s1126] ss:$4 sm:$0xff] %v768
      %v1128 = vld.sshfl [vmem:[#allocation1] sm:$0xff pattern:$0x73625140]
      %1130 = vrot.lane.b32.xlu0 %v1128, 88
      %v1131 = vpop.permute.xlu0 %1130
      %1133 = vst [vmem:[#allocation1] ss:$4 sm:$0xff] %v770
      %s1135 = scalar_lea.vmem [#allocation1], 1
      %1136 = vst [vmem:[%s1135] ss:$4 sm:$0xff] %v771
      %s1138 = scalar_lea.vmem [#allocation1], 2
      %1139 = vst [vmem:[%s1138] ss:$4 sm:$0xff] %v772
      %s1141 = scalar_lea.vmem [#allocation1], 3
      %1142 = vst [vmem:[%s1141] ss:$4 sm:$0xff] %v773
      %v1143 = vld.sshfl [vmem:[#allocation1] sm:$0xff pattern:$0x73625140]
      %1145 = vrot.lane.b32.xlu0 %v1143, 96
      %v1146 = vpop.permute.xlu0 %1145
      %1148 = vst [vmem:[#allocation1] ss:$4 sm:$0xff] %v775
      %s1150 = scalar_lea.vmem [#allocation1], 1
      %1151 = vst [vmem:[%s1150] ss:$4 sm:$0xff] %v776
      %s1153 = scalar_lea.vmem [#allocation1], 2
      %1154 = vst [vmem:[%s1153] ss:$4 sm:$0xff] %v777
      %s1156 = scalar_lea.vmem [#allocation1], 3
      %1157 = vst [vmem:[%s1156] ss:$4 sm:$0xff] %v778
      %v1158 = vld.sshfl [vmem:[#allocation1] sm:$0xff pattern:$0x73625140]
      %1160 = vrot.lane.b32.xlu0 %v1158, 104
      %v1161 = vpop.permute.xlu0 %1160
      %1163 = vst [vmem:[#allocation1] ss:$4 sm:$0xff] %v827
      %s1165 = scalar_lea.vmem [#allocation1], 1
      %1166 = vst [vmem:[%s1165] ss:$4 sm:$0xff] %v840
      %s1168 = scalar_lea.vmem [#allocation1], 2
      %1169 = vst [vmem:[%s1168] ss:$4 sm:$0xff] %v853
      %s1171 = scalar_lea.vmem [#allocation1], 3
      %1172 = vst [vmem:[%s1171] ss:$4 sm:$0xff] %v866
      %v1173 = vld.sshfl [vmem:[#allocation1] sm:$0xff pattern:$0x73625140]
      %1175 = vrot.lane.b32.xlu0 %v1173, 112
      %v1176 = vpop.permute.xlu0 %1175
      %1178 = vst [vmem:[#allocation1] ss:$4 sm:$0xff] %v915
      %s1180 = scalar_lea.vmem [#allocation1], 1
      %1181 = vst [vmem:[%s1180] ss:$4 sm:$0xff] %v928
      %s1183 = scalar_lea.vmem [#allocation1], 2
      %1184 = vst [vmem:[%s1183] ss:$4 sm:$0xff] %v941
      %s1186 = scalar_lea.vmem [#allocation1], 3
      %1187 = vst [vmem:[%s1186] ss:$4 sm:$0xff] %v954
      %v1188 = vld.sshfl [vmem:[#allocation1] sm:$0xff pattern:$0x73625140]
      %1190 = vrot.lane.b32.xlu0 %v1188, 120
      %v1191 = vpop.permute.xlu0 %1190
      %vm1192 = vcmask 64512
      %v1194 = vsel %vm1192, %v966, %v981
      %vm1195 = vcmask 130048
      %v1197 = vsel %vm1195, %v1194, %v996
      %vm1198 = vcmask 195584
      %v1200 = vsel %vm1198, %v1197, %v1011
      %vm1201 = vcmask 261120
      %v1203 = vsel %vm1201, %v1200, %v1026
      %vm1204 = vcmask 326656
      %v1206 = vsel %vm1204, %v1203, %v1041
      %vm1207 = vcmask 392192
      %v1209 = vsel %vm1207, %v1206, %v1056
      %vm1210 = vcmask 457728
      %v1212 = vsel %vm1210, %v1209, %v1071
      %vm1213 = vcmask 523264
      %v1215 = vsel %vm1213, %v1212, %v1086
      %vm1216 = vcmask 588800
      %v1218 = vsel %vm1216, %v1215, %v1101
      %vm1219 = vcmask 654336
      %v1221 = vsel %vm1219, %v1218, %v1116
      %vm1222 = vcmask 719872
      %v1224 = vsel %vm1222, %v1221, %v1131
      %vm1225 = vcmask 785408
      %v1227 = vsel %vm1225, %v1224, %v1146
      %vm1228 = vcmask 850944
      %v1230 = vsel %vm1228, %v1227, %v1161
      %vm1231 = vcmask 916480
      %v1233 = vsel %vm1231, %v1230, %v1176
      %vm1234 = vcmask 982016
      %v1236 = vsel %vm1234, %v1233, %v1191
      %v1238 = vld [vmem:[%s1] sm:$0xf]
      %v1239 = vld [vmem:[%s1 + $0x4] sm:$0xf]
      %v1240 = vld [vmem:[%s1 + $0x8] sm:$0xf]
      %v1241 = vld [vmem:[%s1 + $0xc] sm:$0xf]
      %v1242 = vld [vmem:[%s1 + $0x10] sm:$0xf]
      %v1243 = vld [vmem:[%s1 + $0x14] sm:$0xf]
      %v1244 = vld [vmem:[%s1 + $0x18] sm:$0xf]
      %v1245 = vld [vmem:[%s1 + $0x1c] sm:$0xf]
      %v1246 = vld [vmem:[%s1 + $0x20] sm:$0xf]
      %v1247 = vld [vmem:[%s1 + $0x24] sm:$0xf]
      %v1248 = vld [vmem:[%s1 + $0x28] sm:$0xf]
      %v1249 = vld [vmem:[%s1 + $0x2c] sm:$0xf]
      %v1250 = vld [vmem:[%s1 + $0x30] sm:$0xf]
      %v1251 = vld [vmem:[%s1 + $0x34] sm:$0xf]
      %v1252 = vld [vmem:[%s1 + $0x38] sm:$0xf]
      %v1253 = vld [vmem:[%s1 + $0x3c] sm:$0xf]
      %v1270 = vunpack.c.l.b16 %v1238
      %v1271 = vunpack.c.l.b16 %v1239
      %v1272 = vunpack.c.l.b16 %v1240
      %v1273 = vunpack.c.l.b16 %v1241
      %v1274 = vunpack.c.l.b16 %v1242
      %v1275 = vunpack.c.l.b16 %v1243
      %v1276 = vunpack.c.l.b16 %v1244
      %v1277 = vunpack.c.l.b16 %v1245
      %v1278 = vunpack.c.l.b16 %v1246
      %v1279 = vunpack.c.l.b16 %v1247
      %v1280 = vunpack.c.l.b16 %v1248
      %v1281 = vunpack.c.l.b16 %v1249
      %v1282 = vunpack.c.l.b16 %v1250
      %v1283 = vunpack.c.l.b16 %v1251
      %v1284 = vunpack.c.l.b16 %v1252
      %v1285 = vunpack.c.l.b16 %v1253
      %v1286 = vpack.c.b16 %v1271, %v1270
      %v1287 = vpack.c.b16 %v1273, %v1272
      %v1288 = vpack.c.b16 %v1275, %v1274
      %v1289 = vpack.c.b16 %v1277, %v1276
      %v1290 = vpack.c.b16 %v1279, %v1278
      %v1291 = vpack.c.b16 %v1281, %v1280
      %v1292 = vpack.c.b16 %v1283, %v1282
      %v1293 = vpack.c.b16 %v1285, %v1284
      %1302 = vmatpush.bf16.msra.mxu0 %v1293
      %1303 = vmatpush.bf16.msra.mxu0 %v1292
      %1304 = vmatpush.bf16.msra.mxu0 %v1291
      %1305 = vmatpush.bf16.msra.mxu0 %v1290
      %1306 = vmatpush.bf16.msra.mxu0 %v1289
      %1307 = vmatpush.bf16.msra.mxu0 %v1288
      %1308 = vmatpush.bf16.msra.mxu0 %v1287
      %1309 = vmatpush.bf16.msra.mxu0 %v1286
      %1310 = vmatmul.bf16.gmra.mxu0 %v1236
      %v1311 = vpop.f32.mrf.mxu0
      %v1312 = vadd.f32 0.0, %v1311
      %v1313 = vpop.f32.mrf.mxu0
      %v1314 = vadd.f32 0.0, %v1313
      %1315 = vdwg.mxu0
      %v1316 = vld [vmem:[%s2] sm:$0x1]
      %v1318 = vperm.slane %v1316, 0
      %v1320 = vmul.f32 %v1312, %v1318
      %v1321 = vmul.f32 %v1314, %v1318
      %v1322 = vld [vmem:[%s3] sm:$0x1]
      %v1324 = vperm.slane %v1322, 0
      %v1326 = vadd.f32 %v1320, %v1324
      %v1327 = vadd.f32 %v1321, %v1324
      %v1328 = vmul.f32 %v1326, 0.2
      %v1329 = vmul.f32 %v1327, 0.2
      %v1330 = vmax.f32 %v1326, %v1328
      %v1331 = vmax.f32 %v1327, %v1329
      %v1334 = vrot.slane %v1330, 4
      %v1335 = vrot.slane %v1331, 4
      %v1338 = vpack.c.bf16 %v1330, %v1330
      %v1339 = vpack.c.bf16 %v1334, %v1334
      %v1340 = vpack.c.bf16 %v1331, %v1331
      %v1341 = vpack.c.bf16 %v1335, %v1335
      %vm1342 = vcmask 123904
      %1343 = vst.msk [vmem:[%s202] sm:$0x3] %vm1342, %v1338
      %1344 = vst.msk [vmem:[%s202 + $0x2] sm:$0x3] %vm1342, %v1339
      %1345 = vst.msk [vmem:[%s202 + $0x4] sm:$0x3] %vm1342, %v1340
      %1346 = vst.msk [vmem:[%s202 + $0x6] sm:$0x3] %vm1342, %v1341
      %p1347 = scmp.lt.s32.totalorder %s15, 1
      %s1348 = scalar_select %p1347, %s15, 1
      %s1349 = smul.addr %s1348, 4
      %s1350 = smul.addr %s1349, 2
      %s1351 = scalar_lea.vmem %s4, %s1350
      // Predicated region
      $region37: #{dcgan_d_forward.4} parent=35 // pred_check
        %p1352 = pneg %p122
      $region38: #{dcgan_d_forward.4} parent=35 // pred_check_branch
        %1354 = sbr.rel (%p1352) target = $region40
      $region39: #{dcgan_d_forward.4} parent=35 // pred_region
        _
      $region40: #{dcgan_d_forward.4} parent=35 // pred_fallthru
        _
    $region36: #{dcgan_d_forward.4} parent=5 // pred_fallthru
      _
    %p1355 = scmp.le.s32.totalorder 2, %s10
    // Predicated region
    $region41: #{dcgan_d_forward.4} parent=5 // pred_check
      %p1356 = pneg %p1355
    $region42: #{dcgan_d_forward.4} parent=5 // pred_check_branch
      %1358 = sbr.rel (%p1356) target = $region44
    $region43: #{dcgan_d_forward.4} parent=5 // pred_region
      %s1359 = ssub.s32 %s10, 2
      // Predicated region
      $region45: #{dcgan_d_forward.4} parent=43 // pred_check
        %p1360 = pneg %p128
      $region46: #{dcgan_d_forward.4} parent=43 // pred_check_branch
        %1362 = sbr.rel (%p1360) target = $region48
      $region47: #{dcgan_d_forward.4} parent=43 // pred_region
        %p1363 = scmp.lt.s32.totalorder %s16, 1
        %s1364 = scalar_select %p1363, %s16, 1
        %s1365 = smul.addr %s1364, 4
        %s1366 = smul.addr %s1365, 2
        %s1367 = scalar_lea.vmem %s4, %s1366
      $region48: #{dcgan_d_forward.4} parent=43 // pred_fallthru
        _
    $region44: #{dcgan_d_forward.4} parent=5 // pred_fallthru
      _
  $region6: #{dcgan_d_forward.4} parent=0 // loop_footer
    %s14 = sadd.s32 1, %s10
  $region7: #{dcgan_d_forward.4} parent=0 // loop_footer_branch
    %9 = sbr.rel target = $region3
  $region8: #{dcgan_d_forward.4} parent=0 // loop_exit
    _

</llo_original>
